<compile_context>
chip_gen: v7x
topology: tpu7x:2x2x1
jax: 0.10.0
libtpu: 0.0.40
codegen_flags: <defaults>
</compile_context>

<pallas_src>
import jax
import jax.numpy as jnp
from jax.experimental import pallas as pl
from jax.experimental.pallas import tpu as pltpu

BN_EPS = 1e-5


# ----------------------------- kernel helpers -------------------------------


def _halo(x):
    """(x[:, l-1, :], x[:, l+1, :]) with zero boundaries (Conv1d pad=1).

    Shifts go through pltpu.roll along the sublane axis (XLU slot) plus an
    iota boundary mask — no zero-row materialisation, no slice+concat copies.
    """
    L = x.shape[1]
    pos = jax.lax.broadcasted_iota(jnp.int32, x.shape, 1)
    x_m1 = jnp.where(pos == 0, 0.0, pltpu.roll(x, 1, axis=1))       # x[l-1]
    x_p1 = jnp.where(pos == L - 1, 0.0, pltpu.roll(x, L - 1, axis=1))  # x[l+1]
    return x_m1, x_p1


def _conv_mxu(x, w_flat):
    """Conv1d(k=3, pad=1) as a single bf16 im2col MXU dot.

    x      : (N, L, Ci) f32 activations
    w_flat : (3*Ci, O) bf16 weight, row index k*Ci + ci (tap k -> input l+k-1)
    returns: (N*L, O) f32 conv output rows (no bias; bias folded into BN shift)
    """
    N, L, Ci = x.shape
    x_m1, x_p1 = _halo(x)
    xs = jnp.concatenate([x_m1, x, x_p1], axis=2)                   # (N, L, 3*Ci)
    return jnp.dot(xs.reshape(N * L, 3 * Ci).astype(jnp.bfloat16), w_flat,
                   preferred_element_type=jnp.float32)


def _bn_act_pool(y, scale, shift, apply_relu, N, L):
    """Folded eval-mode BN (+conv bias) + optional ReLU + MaxPool1d(2,2).

    y: (N*L, O) f32 conv output rows.  Returns (N, L//2, O) f32.
    MaxPool pairs never cross samples because L is even at every stage.
    """
    O = y.shape[-1]
    y = y * scale + shift
    if apply_relu:
        y = jnp.maximum(y, 0.0)
    y = jnp.max(y.reshape(N * L // 2, 2, O), axis=1)
    return y.reshape(N, L // 2, O)


# ----------------------------- Pallas kernel --------------------------------


def _bsformer_kernel(x_ref,
                     w1_ref, b1_ref, w2_ref, b2_ref,
                     c1_ref, s1_ref, t1_ref,
                     c2_ref, s2_ref, t2_ref,
                     c3_ref, s3_ref, t3_ref,
                     wl_ref, bl_ref,
                     cwsw_ref, out_ref):
    x = x_ref[...]                                                  # (N, B) f32
    N, B = x.shape

    # ---- weighter: Linear(B,512) -> ReLU -> Linear(512,B) -> Sigmoid ----
    # MXU dots take bf16 operands; bias / activation math stays f32.
    h = jnp.dot(x.astype(jnp.bfloat16), w1_ref[...],
                preferred_element_type=jnp.float32) + b1_ref[...]
    h = jnp.maximum(h, 0.0)
    z = jnp.dot(h.astype(jnp.bfloat16), w2_ref[...],
                preferred_element_type=jnp.float32) + b2_ref[...]
    cw = jax.nn.sigmoid(z)

    # ---- Sparse() ----
    # TODO(synk): `Sparse()` is not defined in the reference snippet; it is
    # implemented as zeroing channel weights below the batch-global mean.
    total = jnp.sum(jnp.sum(cw, axis=1, keepdims=True), axis=0, keepdims=True)
    thresh = total * (1.0 / float(N * B))
    sw = jnp.where(cw >= thresh, cw, 0.0)

    # channel_weights | sparse_weights packed into one lane-denser store.
    cwsw_ref[...] = jnp.concatenate([cw, sw], axis=1)               # (N, 2B)

    # ---- reweight + conv block 1 (Ci=1): pure VPU broadcast-MAC ----
    a = (x * sw)[:, :, None]                                        # (N, B, 1)
    a_m1, a_p1 = _halo(a)
    c1 = c1_ref[...]                                                # (3, 16) f32 taps
    y = a_m1 * c1[0:1, :] + a * c1[1:2, :] + a_p1 * c1[2:3, :]      # (N, B, 16)
    a = _bn_act_pool(y.reshape(N * B, c1.shape[1]),
                     s1_ref[...], t1_ref[...], True, N, B)          # (N, B/2, 16)

    # ---- conv blocks 2 & 3: one bf16 im2col MXU dot each ----
    a = _bn_act_pool(_conv_mxu(a, c2_ref[...]),
                     s2_ref[...], t2_ref[...], True, N, B // 2)     # (N, B/4, 8)
    a = _bn_act_pool(_conv_mxu(a, c3_ref[...]),
                     s3_ref[...], t3_ref[...], False, N, B // 4)    # (N, B/8, 4), no ReLU

    # ---- Flatten + final Linear: ONE dot ----
    # Static row slices + one lane concat build the (N, L3*C3) slab in l-major
    # order; wl is pre-permuted host-side so this equals PyTorch's
    # channel-major Flatten + Linear.
    L3 = a.shape[1]
    a_flat = jnp.concatenate([a[:, l, :] for l in range(L3)], axis=1)
    out_ref[...] = jnp.dot(a_flat.astype(jnp.bfloat16), wl_ref[...],
                           preferred_element_type=jnp.float32) + bl_ref[...]


# ------------------------------ Host wrapper ---------------------------------


def bsformer_forward(X, params):
    N, bands = X.shape
    assert bands % 8 == 0, "bands must be divisible by 8 (3x MaxPool1d(2,2))"
    n_classes = params["bl"].shape[1]
    out_shape = (jax.ShapeDtypeStruct((N, 2 * bands), jnp.float32),   # cw | sw packed
                 jax.ShapeDtypeStruct((N, n_classes), jnp.float32))   # logits
    packed, logits = pl.pallas_call(
        _bsformer_kernel,
        out_shape=out_shape,
        compiler_params=pltpu.CompilerParams(
            vmem_limit_bytes=32 * 1024 * 1024),
    )(X, params["w1"], params["b1"], params["w2"], params["b2"],
      params["c1"], params["s1"], params["t1"],
      params["c2"], params["s2"], params["t2"],
      params["c3"], params["s3"], params["t3"],
      params["wl"], params["bl"])
    channel_weights = packed[:, :bands]
    sparse_weights = packed[:, bands:]
    return channel_weights, sparse_weights, logits


# ------------------------------ Parameters -----------------------------------


def bn_affine(conv_bias, gamma, beta, running_mean, running_var):
    """Fold conv bias + eval-mode BatchNorm1d into (1, O) scale/shift vectors."""
    scale = gamma / jnp.sqrt(running_var + BN_EPS)
    shift = (conv_bias - running_mean) * scale + beta
    return scale[None, :], shift[None, :]


def init_params(key, bands, number_of_classes, last_layer_input):
    assert last_layer_input == 4 * (bands // 8)
    ks = jax.random.split(key, 12)

    def dense(k, fin, fout):
        return jax.random.normal(k, (fin, fout), jnp.float32) / jnp.sqrt(float(fin))

    p = {}
    # weighter: Linear(bands,512) -> ReLU -> Linear(512,bands) -> Sigmoid
    # Matmul weights stored bf16 (MXU operands); biases stay f32 (VPU math).
    p["w1"] = dense(ks[0], bands, 512).astype(jnp.bfloat16)
    p["b1"] = 0.01 * jax.random.normal(ks[1], (1, 512), jnp.float32)
    p["w2"] = dense(ks[2], 512, bands).astype(jnp.bfloat16)
    p["b2"] = 0.01 * jax.random.normal(ks[3], (1, bands), jnp.float32)

    # classnet conv stack.  BatchNorm1d is eval mode with PyTorch-default
    # running stats (mean 0, var 1, gamma 1, beta 0); conv bias is folded in.
    channels = [(16, 1), (8, 16), (4, 8)]
    for i, (o, ci) in enumerate(channels, start=1):
        w = jax.random.normal(ks[3 + i], (3, o, ci), jnp.float32) / jnp.sqrt(3.0 * ci)
        # flatten to (3*Ci, O) with row index k*Ci + ci to match in-kernel im2col
        w_flat = jnp.transpose(w, (0, 2, 1)).reshape(3 * ci, o)
        if i == 1:
            p["c1"] = w_flat                      # (3, 16) f32 tap rows (VPU conv)
        else:
            p[f"c{i}"] = w_flat.astype(jnp.bfloat16)
        cb = 0.01 * jax.random.normal(ks[6 + i], (o,), jnp.float32)
        gamma = jnp.ones((o,), jnp.float32)
        beta = jnp.zeros((o,), jnp.float32)
        rm = jnp.zeros((o,), jnp.float32)
        rv = jnp.ones((o,), jnp.float32)
        p[f"s{i}"], p[f"t{i}"] = bn_affine(cb, gamma, beta, rm, rv)

    # final Linear(last_layer_input, classes).  PyTorch Flatten is
    # channel-major (row index c*L3 + l); the kernel flattens l-major
    # (row index l*C3 + c), so pre-permute + pre-flatten the weight once here.
    c3_out = channels[-1][0]
    l3 = last_layer_input // c3_out
    wl = dense(ks[10], last_layer_input, number_of_classes)
    p["wl"] = (wl.reshape(c3_out, l3, number_of_classes)
                 .transpose(1, 0, 2)
                 .reshape(l3 * c3_out, number_of_classes)
                 .astype(jnp.bfloat16))
    p["bl"] = 0.01 * jax.random.normal(ks[11], (1, number_of_classes), jnp.float32)
    return p


# ------------------------ Pure-JAX reference (checks) ------------------------


def _forward_ref(X, params):
    """Pure-JAX reference mirroring the kernel's bf16 matmul-operand rounding."""
    f32 = jnp.float32

    def mm(a, w):   # bf16 operands, f32 accumulation (same rounding as kernel)
        return jnp.dot(a.astype(jnp.bfloat16).astype(f32), w.astype(f32))

    h = jnp.maximum(mm(X, params["w1"]) + params["b1"], 0.0)
    cw = jax.nn.sigmoid(mm(h, params["w2"]) + params["b2"])
    sw = jnp.where(cw >= jnp.mean(cw), cw, 0.0)

    def halo(x):
        z = jnp.zeros_like(x[:, :1, :])
        return (jnp.concatenate([z, x[:, :-1, :]], axis=1),
                jnp.concatenate([x[:, 1:, :], z], axis=1))

    def pool(y):
        n, l, o = y.shape
        return jnp.max(y.reshape(n, l // 2, 2, o), axis=2)

    # conv block 1 (VPU path in kernel: f32 taps)
    a = (X * sw)[:, :, None]
    am, ap = halo(a)
    c1 = params["c1"]
    y = am * c1[0:1, :] + a * c1[1:2, :] + ap * c1[2:3, :]
    a = pool(jnp.maximum(y * params["s1"] + params["t1"], 0.0))

    def conv_block(a, w_flat, scale, shift, relu):
        n, l, ci = a.shape
        am, ap = halo(a)
        xs = jnp.concatenate([am, a, ap], axis=2).reshape(n * l, 3 * ci)
        y = mm(xs, w_flat).reshape(n, l, -1) * scale + shift
        if relu:
            y = jnp.maximum(y, 0.0)
        return pool(y)

    a = conv_block(a, params["c2"], params["s2"], params["t2"], True)
    a = conv_block(a, params["c3"], params["s3"], params["t3"], False)
    logits = mm(a.reshape(a.shape[0], -1), params["wl"]) + params["bl"]
    return cw, sw, logits


# --------------------------------- Main ---------------------------------------


if __name__ == "__main__":
    bands = 32
    number_of_classes = 6
    last_layer_input = 4 * (bands // 8)        # 4 channels * bands/8 = 16
    batch = 4

    key = jax.random.PRNGKey(0)
    kx, kp = jax.random.split(key)
    X = jax.random.normal(kx, (batch, bands), jnp.float32)
    params = init_params(kp, bands, number_of_classes, last_layer_input)

    channel_weights, sparse_weights, output = bsformer_forward(X, params)
    jax.block_until_ready((channel_weights, sparse_weights, output))

    assert channel_weights.shape == (batch, bands)
    assert sparse_weights.shape == (batch, bands)
    assert output.shape == (batch, number_of_classes)
    assert bool(jnp.all(jnp.isfinite(channel_weights)))
    assert bool(jnp.all(jnp.isfinite(sparse_weights)))
    assert bool(jnp.all(jnp.isfinite(output)))

    # Full-forward numerical check against a pure-JAX reference that applies
    # the same bf16 rounding at the matmul operands (tolerances cover MXU vs
    # XLA accumulation order and transcendental implementation differences).
    ref_cw, ref_sw, ref_out = _forward_ref(X, params)
    assert bool(jnp.allclose(channel_weights, ref_cw, atol=1e-2, rtol=1e-2))
    assert bool(jnp.allclose(sparse_weights, ref_sw, atol=1e-2, rtol=1e-2))
    assert bool(jnp.allclose(output, ref_out, atol=3e-2, rtol=3e-2))
    print("KERNEL_OK")
</pallas_src>

<mosaic_0001>
module attributes {stable_mosaic.version = 11 : i64} {
  func.func @_bsformer_kernel(%arg0: memref<4x32xf32, #tpu.memory_space<vmem>>, %arg1: memref<32x512xbf16, #tpu.memory_space<vmem>>, %arg2: memref<1x512xf32, #tpu.memory_space<vmem>>, %arg3: memref<512x32xbf16, #tpu.memory_space<vmem>>, %arg4: memref<1x32xf32, #tpu.memory_space<vmem>>, %arg5: memref<3x16xf32, #tpu.memory_space<vmem>>, %arg6: memref<1x16xf32, #tpu.memory_space<vmem>>, %arg7: memref<1x16xf32, #tpu.memory_space<vmem>>, %arg8: memref<48x8xbf16, #tpu.memory_space<vmem>>, %arg9: memref<1x8xf32, #tpu.memory_space<vmem>>, %arg10: memref<1x8xf32, #tpu.memory_space<vmem>>, %arg11: memref<24x4xbf16, #tpu.memory_space<vmem>>, %arg12: memref<1x4xf32, #tpu.memory_space<vmem>>, %arg13: memref<1x4xf32, #tpu.memory_space<vmem>>, %arg14: memref<16x6xbf16, #tpu.memory_space<vmem>>, %arg15: memref<1x6xf32, #tpu.memory_space<vmem>>, %arg16: memref<4x64xf32, #tpu.memory_space<vmem>>, %arg17: memref<4x6xf32, #tpu.memory_space<vmem>>) attributes {dimension_semantics = [], scalar_prefetch = 0 : i64, scratch_operands = 0 : i64, tpu.core_type = #tpu.core_type<tc>} {
    %c0 = arith.constant 0 : index
    %c0_0 = arith.constant 0 : index
    %0 = vector.load %arg0[%c0, %c0_0] : memref<4x32xf32, #tpu.memory_space<vmem>>, vector<4x32xf32>
    %1 = arith.truncf %0 : vector<4x32xf32> to vector<4x32xbf16>
    %c0_1 = arith.constant 0 : index
    %c0_2 = arith.constant 0 : index
    %2 = vector.load %arg1[%c0_1, %c0_2] : memref<32x512xbf16, #tpu.memory_space<vmem>>, vector<32x512xbf16>
    %cst = arith.constant dense<0.000000e+00> : vector<4x512xf32>
    %3 = tpu.matmul %1, %2, %cst {dimension_numbers = #tpu.dot_dimension_numbers<[1], [0], [0], [1], [0, 0, 1, 1], [], []>} : vector<4x32xbf16>, vector<32x512xbf16>, vector<4x512xf32> -> vector<4x512xf32>
    %c0_3 = arith.constant 0 : index
    %c0_4 = arith.constant 0 : index
    %4 = vector.load %arg2[%c0_3, %c0_4] : memref<1x512xf32, #tpu.memory_space<vmem>>, vector<1x512xf32>
    %5 = vector.broadcast %4 : vector<1x512xf32> to vector<4x512xf32>
    %6 = arith.addf %3, %5 : vector<4x512xf32>
    %cst_5 = arith.constant 0.000000e+00 : f32
    %7 = vector.broadcast %cst_5 : f32 to vector<4x512xf32>
    %8 = arith.maximumf %6, %7 : vector<4x512xf32>
    %9 = arith.truncf %8 : vector<4x512xf32> to vector<4x512xbf16>
    %c0_6 = arith.constant 0 : index
    %c0_7 = arith.constant 0 : index
    %10 = vector.load %arg3[%c0_6, %c0_7] : memref<512x32xbf16, #tpu.memory_space<vmem>>, vector<512x32xbf16>
    %cst_8 = arith.constant dense<0.000000e+00> : vector<4x32xf32>
    %11 = tpu.matmul %9, %10, %cst_8 {dimension_numbers = #tpu.dot_dimension_numbers<[1], [0], [0], [1], [0, 0, 1, 1], [], []>} : vector<4x512xbf16>, vector<512x32xbf16>, vector<4x32xf32> -> vector<4x32xf32>
    %c0_9 = arith.constant 0 : index
    %c0_10 = arith.constant 0 : index
    %12 = vector.load %arg4[%c0_9, %c0_10] : memref<1x32xf32, #tpu.memory_space<vmem>>, vector<1x32xf32>
    %13 = vector.broadcast %12 : vector<1x32xf32> to vector<4x32xf32>
    %14 = arith.addf %11, %13 : vector<4x32xf32>
    %15 = arith.negf %14 : vector<4x32xf32>
    %16 = math.exp %15 : vector<4x32xf32>
    %cst_11 = arith.constant 1.000000e+00 : f32
    %17 = vector.broadcast %cst_11 : f32 to vector<4x32xf32>
    %18 = arith.addf %17, %16 : vector<4x32xf32>
    %19 = arith.divf %17, %18 : vector<4x32xf32>
    %cst_12 = arith.constant dense<0.000000e+00> : vector<4xf32>
    %20 = vector.multi_reduction <add>, %19, %cst_12 [1] : vector<4x32xf32> to vector<4xf32>
    %21 = vector.shape_cast %20 : vector<4xf32> to vector<4x1xf32>
    %cst_13 = arith.constant dense<0.000000e+00> : vector<1xf32>
    %22 = vector.multi_reduction <add>, %21, %cst_13 [0] : vector<4x1xf32> to vector<1xf32>
    %23 = vector.shape_cast %22 : vector<1xf32> to vector<1x1xf32>
    %cst_14 = arith.constant 7.812500e-03 : f32
    %24 = vector.broadcast %cst_14 : f32 to vector<1x1xf32>
    %25 = arith.mulf %23, %24 : vector<1x1xf32>
    %26 = vector.broadcast %25 : vector<1x1xf32> to vector<4x32xf32>
    %27 = arith.cmpf oge, %19, %26 : vector<4x32xf32>
    %cst_15 = arith.constant 0.000000e+00 : f32
    %28 = vector.broadcast %cst_15 : f32 to vector<4x32xf32>
    %29 = arith.select %27, %19, %28 : vector<4x32xi1>, vector<4x32xf32>
    %30 = tpu.concatenate %19, %29 in 1 : vector<4x32xf32>, vector<4x32xf32> -> vector<4x64xf32>
    %c0_16 = arith.constant 0 : index
    %c0_17 = arith.constant 0 : index
    %31 = vector.load %arg16[%c0_16, %c0_17] : memref<4x64xf32, #tpu.memory_space<vmem>>, vector<4x64xf32>
    tpu.vector_store %arg16[%c0_16, %c0_17], %30 {strides = array<i32>} : memref<4x64xf32, #tpu.memory_space<vmem>>, vector<4x64xf32>,
    %32 = arith.mulf %0, %29 : vector<4x32xf32>
    %33 = vector.shape_cast %32 : vector<4x32xf32> to vector<4x32x1xf32>
    %34 = tpu.iota {dimensions = array<i32: 1>} : vector<4x32x1xi32>
    %c0_i32 = arith.constant 0 : i32
    %35 = vector.broadcast %c0_i32 : i32 to vector<4x32x1xi32>
    %36 = arith.cmpi eq, %34, %35 : vector<4x32x1xi32>
    %c1_i32 = arith.constant 1 : i32
    %37 = tpu.dynamic_rotate %33 by %c1_i32 dim 1 : vector<4x32x1xf32>, i32 -> vector<4x32x1xf32>
    %cst_18 = arith.constant 0.000000e+00 : f32
    %38 = vector.broadcast %cst_18 : f32 to vector<4x32x1xf32>
    %39 = arith.select %36, %38, %37 : vector<4x32x1xi1>, vector<4x32x1xf32>
    %c31_i32 = arith.constant 31 : i32
    %40 = vector.broadcast %c31_i32 : i32 to vector<4x32x1xi32>
    %41 = arith.cmpi eq, %34, %40 : vector<4x32x1xi32>
    %c31_i32_19 = arith.constant 31 : i32
    %42 = tpu.dynamic_rotate %33 by %c31_i32_19 dim 1 : vector<4x32x1xf32>, i32 -> vector<4x32x1xf32>
    %cst_20 = arith.constant 0.000000e+00 : f32
    %43 = vector.broadcast %cst_20 : f32 to vector<4x32x1xf32>
    %44 = arith.select %41, %43, %42 : vector<4x32x1xi1>, vector<4x32x1xf32>
    %c0_21 = arith.constant 0 : index
    %c0_22 = arith.constant 0 : index
    %45 = vector.load %arg5[%c0_21, %c0_22] : memref<3x16xf32, #tpu.memory_space<vmem>>, vector<3x16xf32>
    %46 = vector.extract_strided_slice %45 {offsets = [0, 0], sizes = [1, 16], strides = [1, 1]} : vector<3x16xf32> to vector<1x16xf32>
    %47 = vector.shape_cast %46 : vector<1x16xf32> to vector<1x1x16xf32>
    %48 = vector.broadcast %39 : vector<4x32x1xf32> to vector<4x32x16xf32>
    %49 = vector.broadcast %47 : vector<1x1x16xf32> to vector<4x32x16xf32>
    %50 = arith.mulf %48, %49 : vector<4x32x16xf32>
    %51 = vector.extract_strided_slice %45 {offsets = [1, 0], sizes = [1, 16], strides = [1, 1]} : vector<3x16xf32> to vector<1x16xf32>
    %52 = vector.shape_cast %51 : vector<1x16xf32> to vector<1x1x16xf32>
    %53 = vector.broadcast %33 : vector<4x32x1xf32> to vector<4x32x16xf32>
    %54 = vector.broadcast %52 : vector<1x1x16xf32> to vector<4x32x16xf32>
    %55 = arith.mulf %53, %54 : vector<4x32x16xf32>
    %56 = arith.addf %50, %55 : vector<4x32x16xf32>
    %57 = vector.extract_strided_slice %45 {offsets = [2, 0], sizes = [1, 16], strides = [1, 1]} : vector<3x16xf32> to vector<1x16xf32>
    %58 = vector.shape_cast %57 : vector<1x16xf32> to vector<1x1x16xf32>
    %59 = vector.broadcast %44 : vector<4x32x1xf32> to vector<4x32x16xf32>
    %60 = vector.broadcast %58 : vector<1x1x16xf32> to vector<4x32x16xf32>
    %61 = arith.mulf %59, %60 : vector<4x32x16xf32>
    %62 = arith.addf %56, %61 : vector<4x32x16xf32>
    %63 = vector.shape_cast %62 : vector<4x32x16xf32> to vector<128x16xf32>
    %c0_23 = arith.constant 0 : index
    %c0_24 = arith.constant 0 : index
    %64 = vector.load %arg6[%c0_23, %c0_24] : memref<1x16xf32, #tpu.memory_space<vmem>>, vector<1x16xf32>
    %c0_25 = arith.constant 0 : index
    %c0_26 = arith.constant 0 : index
    %65 = vector.load %arg7[%c0_25, %c0_26] : memref<1x16xf32, #tpu.memory_space<vmem>>, vector<1x16xf32>
    %66 = vector.broadcast %64 : vector<1x16xf32> to vector<128x16xf32>
    %67 = arith.mulf %63, %66 : vector<128x16xf32>
    %68 = vector.broadcast %65 : vector<1x16xf32> to vector<128x16xf32>
    %69 = arith.addf %67, %68 : vector<128x16xf32>
    %cst_27 = arith.constant 0.000000e+00 : f32
    %70 = vector.broadcast %cst_27 : f32 to vector<128x16xf32>
    %71 = arith.maximumf %69, %70 : vector<128x16xf32>
    %72 = vector.shape_cast %71 : vector<128x16xf32> to vector<64x2x16xf32>
    %cst_28 = arith.constant dense<0xFF800000> : vector<64x16xf32>
    %73 = vector.multi_reduction <maximumf>, %72, %cst_28 [1] : vector<64x2x16xf32> to vector<64x16xf32>
    %74 = vector.shape_cast %73 : vector<64x16xf32> to vector<4x16x16xf32>
    %c0_29 = arith.constant 0 : index
    %c0_30 = arith.constant 0 : index
    %75 = vector.load %arg8[%c0_29, %c0_30] : memref<48x8xbf16, #tpu.memory_space<vmem>>, vector<48x8xbf16>
    %76 = tpu.iota {dimensions = array<i32: 1>} : vector<4x16x16xi32>
    %c0_i32_31 = arith.constant 0 : i32
    %77 = vector.broadcast %c0_i32_31 : i32 to vector<4x16x16xi32>
    %78 = arith.cmpi eq, %76, %77 : vector<4x16x16xi32>
    %c1_i32_32 = arith.constant 1 : i32
    %79 = tpu.dynamic_rotate %74 by %c1_i32_32 dim 1 : vector<4x16x16xf32>, i32 -> vector<4x16x16xf32>
    %cst_33 = arith.constant 0.000000e+00 : f32
    %80 = vector.broadcast %cst_33 : f32 to vector<4x16x16xf32>
    %81 = arith.select %78, %80, %79 : vector<4x16x16xi1>, vector<4x16x16xf32>
    %c15_i32 = arith.constant 15 : i32
    %82 = vector.broadcast %c15_i32 : i32 to vector<4x16x16xi32>
    %83 = arith.cmpi eq, %76, %82 : vector<4x16x16xi32>
    %c15_i32_34 = arith.constant 15 : i32
    %84 = tpu.dynamic_rotate %74 by %c15_i32_34 dim 1 : vector<4x16x16xf32>, i32 -> vector<4x16x16xf32>
    %cst_35 = arith.constant 0.000000e+00 : f32
    %85 = vector.broadcast %cst_35 : f32 to vector<4x16x16xf32>
    %86 = arith.select %83, %85, %84 : vector<4x16x16xi1>, vector<4x16x16xf32>
    %87 = tpu.concatenate %81, %74, %86 in 2 : vector<4x16x16xf32>, vector<4x16x16xf32>, vector<4x16x16xf32> -> vector<4x16x48xf32>
    %88 = vector.shape_cast %87 : vector<4x16x48xf32> to vector<64x48xf32>
    %89 = arith.truncf %88 : vector<64x48xf32> to vector<64x48xbf16>
    %cst_36 = arith.constant dense<0.000000e+00> : vector<64x8xf32>
    %90 = tpu.matmul %89, %75, %cst_36 {dimension_numbers = #tpu.dot_dimension_numbers<[1], [0], [0], [1], [0, 0, 1, 1], [], []>} : vector<64x48xbf16>, vector<48x8xbf16>, vector<64x8xf32> -> vector<64x8xf32>
    %c0_37 = arith.constant 0 : index
    %c0_38 = arith.constant 0 : index
    %91 = vector.load %arg9[%c0_37, %c0_38] : memref<1x8xf32, #tpu.memory_space<vmem>>, vector<1x8xf32>
    %c0_39 = arith.constant 0 : index
    %c0_40 = arith.constant 0 : index
    %92 = vector.load %arg10[%c0_39, %c0_40] : memref<1x8xf32, #tpu.memory_space<vmem>>, vector<1x8xf32>
    %93 = vector.broadcast %91 : vector<1x8xf32> to vector<64x8xf32>
    %94 = arith.mulf %90, %93 : vector<64x8xf32>
    %95 = vector.broadcast %92 : vector<1x8xf32> to vector<64x8xf32>
    %96 = arith.addf %94, %95 : vector<64x8xf32>
    %cst_41 = arith.constant 0.000000e+00 : f32
    %97 = vector.broadcast %cst_41 : f32 to vector<64x8xf32>
    %98 = arith.maximumf %96, %97 : vector<64x8xf32>
    %99 = vector.shape_cast %98 : vector<64x8xf32> to vector<32x2x8xf32>
    %cst_42 = arith.constant dense<0xFF800000> : vector<32x8xf32>
    %100 = vector.multi_reduction <maximumf>, %99, %cst_42 [1] : vector<32x2x8xf32> to vector<32x8xf32>
    %101 = vector.shape_cast %100 : vector<32x8xf32> to vector<4x8x8xf32>
    %c0_43 = arith.constant 0 : index
    %c0_44 = arith.constant 0 : index
    %102 = vector.load %arg11[%c0_43, %c0_44] : memref<24x4xbf16, #tpu.memory_space<vmem>>, vector<24x4xbf16>
    %103 = tpu.iota {dimensions = array<i32: 1>} : vector<4x8x8xi32>
    %c0_i32_45 = arith.constant 0 : i32
    %104 = vector.broadcast %c0_i32_45 : i32 to vector<4x8x8xi32>
    %105 = arith.cmpi eq, %103, %104 : vector<4x8x8xi32>
    %c1_i32_46 = arith.constant 1 : i32
    %106 = tpu.dynamic_rotate %101 by %c1_i32_46 dim 1 : vector<4x8x8xf32>, i32 -> vector<4x8x8xf32>
    %cst_47 = arith.constant 0.000000e+00 : f32
    %107 = vector.broadcast %cst_47 : f32 to vector<4x8x8xf32>
    %108 = arith.select %105, %107, %106 : vector<4x8x8xi1>, vector<4x8x8xf32>
    %c7_i32 = arith.constant 7 : i32
    %109 = vector.broadcast %c7_i32 : i32 to vector<4x8x8xi32>
    %110 = arith.cmpi eq, %103, %109 : vector<4x8x8xi32>
    %c7_i32_48 = arith.constant 7 : i32
    %111 = tpu.dynamic_rotate %101 by %c7_i32_48 dim 1 : vector<4x8x8xf32>, i32 -> vector<4x8x8xf32>
    %cst_49 = arith.constant 0.000000e+00 : f32
    %112 = vector.broadcast %cst_49 : f32 to vector<4x8x8xf32>
    %113 = arith.select %110, %112, %111 : vector<4x8x8xi1>, vector<4x8x8xf32>
    %114 = tpu.concatenate %108, %101, %113 in 2 : vector<4x8x8xf32>, vector<4x8x8xf32>, vector<4x8x8xf32> -> vector<4x8x24xf32>
    %115 = vector.shape_cast %114 : vector<4x8x24xf32> to vector<32x24xf32>
    %116 = arith.truncf %115 : vector<32x24xf32> to vector<32x24xbf16>
    %cst_50 = arith.constant dense<0.000000e+00> : vector<32x4xf32>
    %117 = tpu.matmul %116, %102, %cst_50 {dimension_numbers = #tpu.dot_dimension_numbers<[1], [0], [0], [1], [0, 0, 1, 1], [], []>} : vector<32x24xbf16>, vector<24x4xbf16>, vector<32x4xf32> -> vector<32x4xf32>
    %c0_51 = arith.constant 0 : index
    %c0_52 = arith.constant 0 : index
    %118 = vector.load %arg12[%c0_51, %c0_52] : memref<1x4xf32, #tpu.memory_space<vmem>>, vector<1x4xf32>
    %c0_53 = arith.constant 0 : index
    %c0_54 = arith.constant 0 : index
    %119 = vector.load %arg13[%c0_53, %c0_54] : memref<1x4xf32, #tpu.memory_space<vmem>>, vector<1x4xf32>
    %120 = vector.broadcast %118 : vector<1x4xf32> to vector<32x4xf32>
    %121 = arith.mulf %117, %120 : vector<32x4xf32>
    %122 = vector.broadcast %119 : vector<1x4xf32> to vector<32x4xf32>
    %123 = arith.addf %121, %122 : vector<32x4xf32>
    %124 = vector.shape_cast %123 : vector<32x4xf32> to vector<16x2x4xf32>
    %cst_55 = arith.constant dense<0xFF800000> : vector<16x4xf32>
    %125 = vector.multi_reduction <maximumf>, %124, %cst_55 [1] : vector<16x2x4xf32> to vector<16x4xf32>
    %126 = vector.shape_cast %125 : vector<16x4xf32> to vector<4x4x4xf32>
    %127 = vector.extract_strided_slice %126 {offsets = [0, 0, 0], sizes = [4, 1, 4], strides = [1, 1, 1]} : vector<4x4x4xf32> to vector<4x1x4xf32>
    %128 = vector.shape_cast %127 : vector<4x1x4xf32> to vector<4x4xf32>
    %129 = vector.extract_strided_slice %126 {offsets = [0, 1, 0], sizes = [4, 1, 4], strides = [1, 1, 1]} : vector<4x4x4xf32> to vector<4x1x4xf32>
    %130 = vector.shape_cast %129 : vector<4x1x4xf32> to vector<4x4xf32>
    %131 = vector.extract_strided_slice %126 {offsets = [0, 2, 0], sizes = [4, 1, 4], strides = [1, 1, 1]} : vector<4x4x4xf32> to vector<4x1x4xf32>
    %132 = vector.shape_cast %131 : vector<4x1x4xf32> to vector<4x4xf32>
    %133 = vector.extract_strided_slice %126 {offsets = [0, 3, 0], sizes = [4, 1, 4], strides = [1, 1, 1]} : vector<4x4x4xf32> to vector<4x1x4xf32>
    %134 = vector.shape_cast %133 : vector<4x1x4xf32> to vector<4x4xf32>
    %135 = tpu.concatenate %128, %130, %132, %134 in 1 : vector<4x4xf32>, vector<4x4xf32>, vector<4x4xf32>, vector<4x4xf32> -> vector<4x16xf32>
    %136 = arith.truncf %135 : vector<4x16xf32> to vector<4x16xbf16>
    %c0_56 = arith.constant 0 : index
    %c0_57 = arith.constant 0 : index
    %137 = vector.load %arg14[%c0_56, %c0_57] : memref<16x6xbf16, #tpu.memory_space<vmem>>, vector<16x6xbf16>
    %cst_58 = arith.constant dense<0.000000e+00> : vector<4x6xf32>
    %138 = tpu.matmul %136, %137, %cst_58 {dimension_numbers = #tpu.dot_dimension_numbers<[1], [0], [0], [1], [0, 0, 1, 1], [], []>} : vector<4x16xbf16>, vector<16x6xbf16>, vector<4x6xf32> -> vector<4x6xf32>
    %c0_59 = arith.constant 0 : index
    %c0_60 = arith.constant 0 : index
    %139 = vector.load %arg15[%c0_59, %c0_60] : memref<1x6xf32, #tpu.memory_space<vmem>>, vector<1x6xf32>
    %140 = vector.broadcast %139 : vector<1x6xf32> to vector<4x6xf32>
    %141 = arith.addf %138, %140 : vector<4x6xf32>
    %c0_61 = arith.constant 0 : index
    %c0_62 = arith.constant 0 : index
    %142 = vector.load %arg17[%c0_61, %c0_62] : memref<4x6xf32, #tpu.memory_space<vmem>>, vector<4x6xf32>
    tpu.vector_store %arg17[%c0_61, %c0_62], %141 {strides = array<i32>} : memref<4x6xf32, #tpu.memory_space<vmem>>, vector<4x6xf32>,
    return
  }
}

</mosaic_0001>

<llo_original>
// kernel: tpu_custom_call.1
$region0: #{tpu_custom_call.1}
  #allocation0 [shape = 'u32[]', space=smem, size = 0x4, offset = 0x4, fixed_abs, tag = 'smem constant byte address 0x4 - core index']
  #allocation1 [shape = 'u32[144,128]{1,0:T(1,128)}', space=vmem, size = 0x12000, scoped, tag = 'internal scratch']
  %s0 = inlined_call_operand.vmem [shape: f32[4,32], index: 0, kind: input, shape index: {}]
  %s1 = inlined_call_operand.vmem [shape: bf16[32,512], index: 1, kind: input, shape index: {}]
  %s2 = inlined_call_operand.vmem [shape: f32[1,512], index: 2, kind: input, shape index: {}]
  %s3 = inlined_call_operand.vmem [shape: bf16[512,32], index: 3, kind: input, shape index: {}]
  %s4 = inlined_call_operand.vmem [shape: f32[1,32], index: 4, kind: input, shape index: {}]
  %s5 = inlined_call_operand.vmem [shape: f32[3,16], index: 5, kind: input, shape index: {}]
  %s6 = inlined_call_operand.vmem [shape: f32[1,16], index: 6, kind: input, shape index: {}]
  %s7 = inlined_call_operand.vmem [shape: f32[1,16], index: 7, kind: input, shape index: {}]
  %s8 = inlined_call_operand.vmem [shape: bf16[48,8], index: 8, kind: input, shape index: {}]
  %s9 = inlined_call_operand.vmem [shape: f32[1,8], index: 9, kind: input, shape index: {}]
  %s10 = inlined_call_operand.vmem [shape: f32[1,8], index: 10, kind: input, shape index: {}]
  %s11 = inlined_call_operand.vmem [shape: bf16[24,4], index: 11, kind: input, shape index: {}]
  %s12 = inlined_call_operand.vmem [shape: f32[1,4], index: 12, kind: input, shape index: {}]
  %s13 = inlined_call_operand.vmem [shape: f32[1,4], index: 13, kind: input, shape index: {}]
  %s14 = inlined_call_operand.vmem [shape: bf16[16,6], index: 14, kind: input, shape index: {}]
  %s15 = inlined_call_operand.vmem [shape: f32[1,6], index: 15, kind: input, shape index: {}]
  %s16 = inlined_call_operand.hbm [shape: f32[4,64], index: 16, kind: output, shape index: {0}]
  %s17 = inlined_call_operand.hbm [shape: f32[4,6], index: 17, kind: output, shape index: {1}]
  %18 = xla_tuple %s16, %s17
  %s19 = sld [smem:[#allocation0]]
  $region82: #{tpu_custom_call.1} parent=0
    _
  %s21 = ssub.s32 1, %s19
  %s22 = scalar_select 0, %s21, %s19
  $region1: #{tpu_custom_call.1} parent=0
    #allocation2 [shape = 'u8[2048]{0}', space=vmem, size = 0x800, scoped, tag = 'output window, operand 0, single buffered']
    #allocation3 [shape = 's32[1]{0}', space=sflag, size = 0x4, scoped, tag = 'scoped memory for tpu_custom_call.1']
    #allocation4 [shape = 'u8[2048]{0}', space=vmem, size = 0x800, scoped, tag = 'output window, operand 1, single buffered']
    #allocation5 [shape = 's32[1]{0}', space=sflag, size = 0x4, scoped, tag = 'scoped memory for tpu_custom_call.1']
    %23 = vsyncpa [#allocation3], 0
    %24 = vsyncpa [#allocation5], 0
    // Predicated region
    $region2: #{tpu_custom_call.1} parent=1 // pred_check
      _
    $region3: #{tpu_custom_call.1} parent=1 // pred_check_branch
      %26 = sbr.rel (0) target = $region5
    $region4: #{tpu_custom_call.1} parent=1 // pred_region
      _
    $region5: #{tpu_custom_call.1} parent=1 // pred_fallthru
      _
    // Predicated region
    $region6: #{tpu_custom_call.1} parent=1 // pred_check
      _
    $region7: #{tpu_custom_call.1} parent=1 // pred_check_branch
      %28 = sbr.rel (0) target = $region9
    $region8: #{tpu_custom_call.1} parent=1 // pred_region
      _
    $region9: #{tpu_custom_call.1} parent=1 // pred_fallthru
      _
    // Predicated region
    $region10: #{tpu_custom_call.1} parent=1 // pred_check
      _
    $region11: #{tpu_custom_call.1} parent=1 // pred_check_branch
      %30 = sbr.rel (0) target = $region13
    $region12: #{tpu_custom_call.1} parent=1 // pred_region
      _
    $region13: #{tpu_custom_call.1} parent=1 // pred_fallthru
      _
    // Predicated region
    $region14: #{tpu_custom_call.1} parent=1 // pred_check
      _
    $region15: #{tpu_custom_call.1} parent=1 // pred_check_branch
      %32 = sbr.rel (0) target = $region17
    $region16: #{tpu_custom_call.1} parent=1 // pred_region
      _
    $region17: #{tpu_custom_call.1} parent=1 // pred_fallthru
      _
    // Predicated region
    $region18: #{tpu_custom_call.1} parent=1 // pred_check
      _
    $region19: #{tpu_custom_call.1} parent=1 // pred_check_branch
      %34 = sbr.rel (0) target = $region21
    $region20: #{tpu_custom_call.1} parent=1 // pred_region
      _
    $region21: #{tpu_custom_call.1} parent=1 // pred_fallthru
      _
    // Predicated region
    $region22: #{tpu_custom_call.1} parent=1 // pred_check
      _
    $region23: #{tpu_custom_call.1} parent=1 // pred_check_branch
      %36 = sbr.rel (0) target = $region25
    $region24: #{tpu_custom_call.1} parent=1 // pred_region
      _
    $region25: #{tpu_custom_call.1} parent=1 // pred_fallthru
      _
    // Predicated region
    $region26: #{tpu_custom_call.1} parent=1 // pred_check
      _
    $region27: #{tpu_custom_call.1} parent=1 // pred_check_branch
      %38 = sbr.rel (0) target = $region29
    $region28: #{tpu_custom_call.1} parent=1 // pred_region
      _
    $region29: #{tpu_custom_call.1} parent=1 // pred_fallthru
      _
    // Predicated region
    $region30: #{tpu_custom_call.1} parent=1 // pred_check
      _
    $region31: #{tpu_custom_call.1} parent=1 // pred_check_branch
      %40 = sbr.rel (0) target = $region33
    $region32: #{tpu_custom_call.1} parent=1 // pred_region
      _
    $region33: #{tpu_custom_call.1} parent=1 // pred_fallthru
      _
    // Predicated region
    $region34: #{tpu_custom_call.1} parent=1 // pred_check
      _
    $region35: #{tpu_custom_call.1} parent=1 // pred_check_branch
      %42 = sbr.rel (0) target = $region37
    $region36: #{tpu_custom_call.1} parent=1 // pred_region
      _
    $region37: #{tpu_custom_call.1} parent=1 // pred_fallthru
      _
    // Predicated region
    $region38: #{tpu_custom_call.1} parent=1 // pred_check
      _
    $region39: #{tpu_custom_call.1} parent=1 // pred_check_branch
      %44 = sbr.rel (0) target = $region41
    $region40: #{tpu_custom_call.1} parent=1 // pred_region
      _
    $region41: #{tpu_custom_call.1} parent=1 // pred_fallthru
      _
    // Predicated region
    $region42: #{tpu_custom_call.1} parent=1 // pred_check
      _
    $region43: #{tpu_custom_call.1} parent=1 // pred_check_branch
      %46 = sbr.rel (0) target = $region45
    $region44: #{tpu_custom_call.1} parent=1 // pred_region
      _
    $region45: #{tpu_custom_call.1} parent=1 // pred_fallthru
      _
    // Predicated region
    $region46: #{tpu_custom_call.1} parent=1 // pred_check
      _
    $region47: #{tpu_custom_call.1} parent=1 // pred_check_branch
      %48 = sbr.rel (0) target = $region49
    $region48: #{tpu_custom_call.1} parent=1 // pred_region
      _
    $region49: #{tpu_custom_call.1} parent=1 // pred_fallthru
      _
    // Predicated region
    $region50: #{tpu_custom_call.1} parent=1 // pred_check
      _
    $region51: #{tpu_custom_call.1} parent=1 // pred_check_branch
      %50 = sbr.rel (0) target = $region53
    $region52: #{tpu_custom_call.1} parent=1 // pred_region
      _
    $region53: #{tpu_custom_call.1} parent=1 // pred_fallthru
      _
    // Predicated region
    $region54: #{tpu_custom_call.1} parent=1 // pred_check
      _
    $region55: #{tpu_custom_call.1} parent=1 // pred_check_branch
      %52 = sbr.rel (0) target = $region57
    $region56: #{tpu_custom_call.1} parent=1 // pred_region
      _
    $region57: #{tpu_custom_call.1} parent=1 // pred_fallthru
      _
    // Predicated region
    $region58: #{tpu_custom_call.1} parent=1 // pred_check
      _
    $region59: #{tpu_custom_call.1} parent=1 // pred_check_branch
      %54 = sbr.rel (0) target = $region61
    $region60: #{tpu_custom_call.1} parent=1 // pred_region
      _
    $region61: #{tpu_custom_call.1} parent=1 // pred_fallthru
      _
    // Predicated region
    $region62: #{tpu_custom_call.1} parent=1 // pred_check
      _
    $region63: #{tpu_custom_call.1} parent=1 // pred_check_branch
      %56 = sbr.rel (0) target = $region65
    $region64: #{tpu_custom_call.1} parent=1 // pred_region
      _
    $region65: #{tpu_custom_call.1} parent=1 // pred_fallthru
      _
    %v58 = vld [vmem:[%s0] sm:$0xf]
    %v59 = vpack.c.bf16 %v58, %v58
    %v60 = vld [vmem:[%s1] sm:$0xff]
    %v61 = vld [vmem:[%s1 + $0x8] sm:$0xff]
    %v62 = vld [vmem:[%s1 + $0x10] sm:$0xff]
    %v63 = vld [vmem:[%s1 + $0x18] sm:$0xff]
    %v64 = vld [vmem:[%s1 + $0x20] sm:$0xff]
    %v65 = vld [vmem:[%s1 + $0x28] sm:$0xff]
    %v66 = vld [vmem:[%s1 + $0x30] sm:$0xff]
    %v67 = vld [vmem:[%s1 + $0x38] sm:$0xff]
    %v68 = vld [vmem:[%s2] sm:$0xf]
    %v70 = vlaneseq
    %v71 = vshrl.u32 %v70, 7
    %v72 = vsub.s32 0, %v71
    %v73 = vrot.slane %v68, %v72
    %v74 = vlaneseq
    %v75 = vshrl.u32 %v74, 7
    %v76 = vsub.s32 1, %v75
    %v77 = vrot.slane %v68, %v76
    %v78 = vlaneseq
    %v79 = vshrl.u32 %v78, 7
    %v80 = vsub.s32 2, %v79
    %v81 = vrot.slane %v68, %v80
    %v82 = vlaneseq
    %v83 = vshrl.u32 %v82, 7
    %v84 = vsub.s32 3, %v83
    %v85 = vrot.slane %v68, %v84
    %v98 = vunpack.c.l.b16 %v60
    %v99 = vunpack.c.h.b16 %v60
    %v100 = vunpack.c.l.b16 %v61
    %v101 = vunpack.c.h.b16 %v61
    %v102 = vunpack.c.l.b16 %v62
    %v103 = vunpack.c.h.b16 %v62
    %v104 = vunpack.c.l.b16 %v63
    %v105 = vunpack.c.h.b16 %v63
    %v106 = vunpack.c.l.b16 %v64
    %v107 = vunpack.c.h.b16 %v64
    %v108 = vunpack.c.l.b16 %v65
    %v109 = vunpack.c.h.b16 %v65
    %v110 = vunpack.c.l.b16 %v66
    %v111 = vunpack.c.h.b16 %v66
    %v112 = vunpack.c.l.b16 %v67
    %v113 = vunpack.c.h.b16 %v67
    %v114 = vpack.c.b16 %v102, %v98
    %v115 = vpack.c.b16 %v103, %v99
    %v116 = vpack.c.b16 %v104, %v100
    %v117 = vpack.c.b16 %v105, %v101
    %v118 = vpack.c.b16 %v110, %v106
    %v119 = vpack.c.b16 %v111, %v107
    %v120 = vpack.c.b16 %v112, %v108
    %v121 = vpack.c.b16 %v113, %v109
    %vm130 = vcmask 261120
    %v132 = vsel %vm130, %v59, 0
    %134 = vmatprep.subr.bf16.mxu0 %v115
    %135 = vmatpush1.bf16.msra.mxu0 %v114
    %136 = vmatprep.subr.bf16.mxu0 %v119
    %137 = vmatpush1.bf16.msra.mxu0 %v118
    %138 = vmatprep.subr.bf16.mxu0 0
    %139 = vmatpush1.bf16.msra.mxu0 0
    %140 = vmatprep.subr.bf16.mxu0 0
    %141 = vmatpush1.bf16.msra.mxu0 0
    %142 = vmatprep.subr.bf16.mxu0 0
    %143 = vmatpush1.bf16.msra.mxu0 0
    %144 = vmatprep.subr.bf16.mxu0 0
    %145 = vmatpush1.bf16.msra.mxu0 0
    %146 = vmatprep.subr.bf16.mxu0 0
    %147 = vmatpush1.bf16.msra.mxu0 0
    %148 = vmatprep.subr.bf16.mxu0 0
    %149 = vmatpush1.bf16.msra.mxu0 0
    %150 = vmatprep.subr.bf16.mxu0 0
    %151 = vmatpush1.bf16.msra.mxu0 0
    %152 = vmatprep.subr.bf16.mxu0 0
    %153 = vmatpush1.bf16.msra.mxu0 0
    %154 = vmatprep.subr.bf16.mxu0 0
    %155 = vmatpush1.bf16.msra.mxu0 0
    %156 = vmatprep.subr.bf16.mxu0 0
    %157 = vmatpush1.bf16.msra.mxu0 0
    %158 = vmatprep.subr.bf16.mxu0 0
    %159 = vmatpush1.bf16.msra.mxu0 0
    %160 = vmatprep.subr.bf16.mxu0 0
    %161 = vmatpush1.bf16.msra.mxu0 0
    %162 = vmatprep.subr.bf16.mxu0 0
    %163 = vmatpush1.bf16.msra.mxu0 0
    %164 = vmatprep.subr.bf16.mxu0 0
    %165 = vmatpush1.bf16.msra.mxu0 0
    %166 = vmatprep.mubr.bf16.mxu0 0
    %167 = vmatmul.mubr.bf16.gmra.mrb[0].mxu0 %v132
    %v168 = vpop.f32.mrb[0].mxu0
    %v169 = vadd.f32 %v73, %v168
    %v170 = vpop.f32.mrb[0].mxu0
    %v171 = vadd.f32 %v77, %v170
    %v172 = vpop.f32.mrb[0].mxu0
    %v173 = vpop.f32.mrb[0].mxu0
    %174 = vdwg.mxu0
    %175 = vmatprep.subr.bf16.mxu0 %v117
    %176 = vmatpush1.bf16.msra.mxu0 %v116
    %177 = vmatprep.subr.bf16.mxu0 %v121
    %178 = vmatpush1.bf16.msra.mxu0 %v120
    %179 = vmatprep.subr.bf16.mxu0 0
    %180 = vmatpush1.bf16.msra.mxu0 0
    %181 = vmatprep.subr.bf16.mxu0 0
    %182 = vmatpush1.bf16.msra.mxu0 0
    %183 = vmatprep.subr.bf16.mxu0 0
    %184 = vmatpush1.bf16.msra.mxu0 0
    %185 = vmatprep.subr.bf16.mxu0 0
    %186 = vmatpush1.bf16.msra.mxu0 0
    %187 = vmatprep.subr.bf16.mxu0 0
    %188 = vmatpush1.bf16.msra.mxu0 0
    %189 = vmatprep.subr.bf16.mxu0 0
    %190 = vmatpush1.bf16.msra.mxu0 0
    %191 = vmatprep.subr.bf16.mxu0 0
    %192 = vmatpush1.bf16.msra.mxu0 0
    %193 = vmatprep.subr.bf16.mxu0 0
    %194 = vmatpush1.bf16.msra.mxu0 0
    %195 = vmatprep.subr.bf16.mxu0 0
    %196 = vmatpush1.bf16.msra.mxu0 0
    %197 = vmatprep.subr.bf16.mxu0 0
    %198 = vmatpush1.bf16.msra.mxu0 0
    %199 = vmatprep.subr.bf16.mxu0 0
    %200 = vmatpush1.bf16.msra.mxu0 0
    %201 = vmatprep.subr.bf16.mxu0 0
    %202 = vmatpush1.bf16.msra.mxu0 0
    %203 = vmatprep.subr.bf16.mxu0 0
    %204 = vmatpush1.bf16.msra.mxu0 0
    %205 = vmatprep.subr.bf16.mxu0 0
    %206 = vmatpush1.bf16.msra.mxu0 0
    %207 = vmatprep.mubr.bf16.mxu0 0
    %208 = vmatmul.mubr.bf16.gmra.mrb[0].mxu0 %v132
    %v209 = vpop.f32.mrb[0].mxu0
    %v210 = vadd.f32 %v81, %v209
    %v211 = vpop.f32.mrb[0].mxu0
    %v212 = vadd.f32 %v85, %v211
    %v213 = vpop.f32.mrb[0].mxu0
    %v214 = vpop.f32.mrb[0].mxu0
    %215 = vdwg.mxu0
    %v216 = vmax.f32 %v169, 0.0
    %v217 = vmax.f32 %v171, 0.0
    %v218 = vmax.f32 %v210, 0.0
    %v219 = vmax.f32 %v212, 0.0
    %v220 = vpack.c.bf16 %v216, %v216
    %v221 = vpack.c.bf16 %v217, %v217
    %v222 = vpack.c.bf16 %v218, %v218
    %v223 = vpack.c.bf16 %v219, %v219
    %v224 = vld [vmem:[%s3] sm:$0xf]
    %v225 = vld [vmem:[%s3 + $0x4] sm:$0xf]
    %v226 = vld [vmem:[%s3 + $0x8] sm:$0xf]
    %v227 = vld [vmem:[%s3 + $0xc] sm:$0xf]
    %v228 = vld [vmem:[%s3 + $0x10] sm:$0xf]
    %v229 = vld [vmem:[%s3 + $0x14] sm:$0xf]
    %v230 = vld [vmem:[%s3 + $0x18] sm:$0xf]
    %v231 = vld [vmem:[%s3 + $0x1c] sm:$0xf]
    %v232 = vld [vmem:[%s3 + $0x20] sm:$0xf]
    %v233 = vld [vmem:[%s3 + $0x24] sm:$0xf]
    %v234 = vld [vmem:[%s3 + $0x28] sm:$0xf]
    %v235 = vld [vmem:[%s3 + $0x2c] sm:$0xf]
    %v236 = vld [vmem:[%s3 + $0x30] sm:$0xf]
    %v237 = vld [vmem:[%s3 + $0x34] sm:$0xf]
    %v238 = vld [vmem:[%s3 + $0x38] sm:$0xf]
    %v239 = vld [vmem:[%s3 + $0x3c] sm:$0xf]
    %v240 = vld [vmem:[%s3 + $0x40] sm:$0xf]
    %v241 = vld [vmem:[%s3 + $0x44] sm:$0xf]
    %v242 = vld [vmem:[%s3 + $0x48] sm:$0xf]
    %v243 = vld [vmem:[%s3 + $0x4c] sm:$0xf]
    %v244 = vld [vmem:[%s3 + $0x50] sm:$0xf]
    %v245 = vld [vmem:[%s3 + $0x54] sm:$0xf]
    %v246 = vld [vmem:[%s3 + $0x58] sm:$0xf]
    %v247 = vld [vmem:[%s3 + $0x5c] sm:$0xf]
    %v248 = vld [vmem:[%s3 + $0x60] sm:$0xf]
    %v249 = vld [vmem:[%s3 + $0x64] sm:$0xf]
    %v250 = vld [vmem:[%s3 + $0x68] sm:$0xf]
    %v251 = vld [vmem:[%s3 + $0x6c] sm:$0xf]
    %v252 = vld [vmem:[%s3 + $0x70] sm:$0xf]
    %v253 = vld [vmem:[%s3 + $0x74] sm:$0xf]
    %v254 = vld [vmem:[%s3 + $0x78] sm:$0xf]
    %v255 = vld [vmem:[%s3 + $0x7c] sm:$0xf]
    %v256 = vld [vmem:[%s3 + $0x80] sm:$0xf]
    %v257 = vld [vmem:[%s3 + $0x84] sm:$0xf]
    %v258 = vld [vmem:[%s3 + $0x88] sm:$0xf]
    %v259 = vld [vmem:[%s3 + $0x8c] sm:$0xf]
    %v260 = vld [vmem:[%s3 + $0x90] sm:$0xf]
    %v261 = vld [vmem:[%s3 + $0x94] sm:$0xf]
    %v262 = vld [vmem:[%s3 + $0x98] sm:$0xf]
    %v263 = vld [vmem:[%s3 + $0x9c] sm:$0xf]
    %v264 = vld [vmem:[%s3 + $0xa0] sm:$0xf]
    %v265 = vld [vmem:[%s3 + $0xa4] sm:$0xf]
    %v266 = vld [vmem:[%s3 + $0xa8] sm:$0xf]
    %v267 = vld [vmem:[%s3 + $0xac] sm:$0xf]
    %v268 = vld [vmem:[%s3 + $0xb0] sm:$0xf]
    %v269 = vld [vmem:[%s3 + $0xb4] sm:$0xf]
    %v270 = vld [vmem:[%s3 + $0xb8] sm:$0xf]
    %v271 = vld [vmem:[%s3 + $0xbc] sm:$0xf]
    %v272 = vld [vmem:[%s3 + $0xc0] sm:$0xf]
    %v273 = vld [vmem:[%s3 + $0xc4] sm:$0xf]
    %v274 = vld [vmem:[%s3 + $0xc8] sm:$0xf]
    %v275 = vld [vmem:[%s3 + $0xcc] sm:$0xf]
    %v276 = vld [vmem:[%s3 + $0xd0] sm:$0xf]
    %v277 = vld [vmem:[%s3 + $0xd4] sm:$0xf]
    %v278 = vld [vmem:[%s3 + $0xd8] sm:$0xf]
    %v279 = vld [vmem:[%s3 + $0xdc] sm:$0xf]
    %v280 = vld [vmem:[%s3 + $0xe0] sm:$0xf]
    %v281 = vld [vmem:[%s3 + $0xe4] sm:$0xf]
    %v282 = vld [vmem:[%s3 + $0xe8] sm:$0xf]
    %v283 = vld [vmem:[%s3 + $0xec] sm:$0xf]
    %v284 = vld [vmem:[%s3 + $0xf0] sm:$0xf]
    %v285 = vld [vmem:[%s3 + $0xf4] sm:$0xf]
    %v286 = vld [vmem:[%s3 + $0xf8] sm:$0xf]
    %v287 = vld [vmem:[%s3 + $0xfc] sm:$0xf]
    %v288 = vld [vmem:[%s4] sm:$0x1]
    %v290 = vlaneseq
    %v291 = vshrl.u32 %v290, 7
    %v292 = vsub.s32 0, %v291
    %v293 = vrot.slane %v288, %v292
    %v359 = vunpack.c.l.b16 %v224
    %v360 = vunpack.c.l.b16 %v225
    %v361 = vunpack.c.l.b16 %v226
    %v362 = vunpack.c.l.b16 %v227
    %v363 = vunpack.c.l.b16 %v228
    %v364 = vunpack.c.l.b16 %v229
    %v365 = vunpack.c.l.b16 %v230
    %v366 = vunpack.c.l.b16 %v231
    %v367 = vunpack.c.l.b16 %v232
    %v368 = vunpack.c.l.b16 %v233
    %v369 = vunpack.c.l.b16 %v234
    %v370 = vunpack.c.l.b16 %v235
    %v371 = vunpack.c.l.b16 %v236
    %v372 = vunpack.c.l.b16 %v237
    %v373 = vunpack.c.l.b16 %v238
    %v374 = vunpack.c.l.b16 %v239
    %v375 = vunpack.c.l.b16 %v240
    %v376 = vunpack.c.l.b16 %v241
    %v377 = vunpack.c.l.b16 %v242
    %v378 = vunpack.c.l.b16 %v243
    %v379 = vunpack.c.l.b16 %v244
    %v380 = vunpack.c.l.b16 %v245
    %v381 = vunpack.c.l.b16 %v246
    %v382 = vunpack.c.l.b16 %v247
    %v383 = vunpack.c.l.b16 %v248
    %v384 = vunpack.c.l.b16 %v249
    %v385 = vunpack.c.l.b16 %v250
    %v386 = vunpack.c.l.b16 %v251
    %v387 = vunpack.c.l.b16 %v252
    %v388 = vunpack.c.l.b16 %v253
    %v389 = vunpack.c.l.b16 %v254
    %v390 = vunpack.c.l.b16 %v255
    %v391 = vunpack.c.l.b16 %v256
    %v392 = vunpack.c.l.b16 %v257
    %v393 = vunpack.c.l.b16 %v258
    %v394 = vunpack.c.l.b16 %v259
    %v395 = vunpack.c.l.b16 %v260
    %v396 = vunpack.c.l.b16 %v261
    %v397 = vunpack.c.l.b16 %v262
    %v398 = vunpack.c.l.b16 %v263
    %v399 = vunpack.c.l.b16 %v264
    %v400 = vunpack.c.l.b16 %v265
    %v401 = vunpack.c.l.b16 %v266
    %v402 = vunpack.c.l.b16 %v267
    %v403 = vunpack.c.l.b16 %v268
    %v404 = vunpack.c.l.b16 %v269
    %v405 = vunpack.c.l.b16 %v270
    %v406 = vunpack.c.l.b16 %v271
    %v407 = vunpack.c.l.b16 %v272
    %v408 = vunpack.c.l.b16 %v273
    %v409 = vunpack.c.l.b16 %v274
    %v410 = vunpack.c.l.b16 %v275
    %v411 = vunpack.c.l.b16 %v276
    %v412 = vunpack.c.l.b16 %v277
    %v413 = vunpack.c.l.b16 %v278
    %v414 = vunpack.c.l.b16 %v279
    %v415 = vunpack.c.l.b16 %v280
    %v416 = vunpack.c.l.b16 %v281
    %v417 = vunpack.c.l.b16 %v282
    %v418 = vunpack.c.l.b16 %v283
    %v419 = vunpack.c.l.b16 %v284
    %v420 = vunpack.c.l.b16 %v285
    %v421 = vunpack.c.l.b16 %v286
    %v422 = vunpack.c.l.b16 %v287
    %v423 = vpack.c.b16 %v360, %v359
    %v424 = vpack.c.b16 %v362, %v361
    %v425 = vpack.c.b16 %v364, %v363
    %v426 = vpack.c.b16 %v366, %v365
    %v427 = vpack.c.b16 %v368, %v367
    %v428 = vpack.c.b16 %v370, %v369
    %v429 = vpack.c.b16 %v372, %v371
    %v430 = vpack.c.b16 %v374, %v373
    %v431 = vpack.c.b16 %v376, %v375
    %v432 = vpack.c.b16 %v378, %v377
    %v433 = vpack.c.b16 %v380, %v379
    %v434 = vpack.c.b16 %v382, %v381
    %v435 = vpack.c.b16 %v384, %v383
    %v436 = vpack.c.b16 %v386, %v385
    %v437 = vpack.c.b16 %v388, %v387
    %v438 = vpack.c.b16 %v390, %v389
    %v439 = vpack.c.b16 %v392, %v391
    %v440 = vpack.c.b16 %v394, %v393
    %v441 = vpack.c.b16 %v396, %v395
    %v442 = vpack.c.b16 %v398, %v397
    %v443 = vpack.c.b16 %v400, %v399
    %v444 = vpack.c.b16 %v402, %v401
    %v445 = vpack.c.b16 %v404, %v403
    %v446 = vpack.c.b16 %v406, %v405
    %v447 = vpack.c.b16 %v408, %v407
    %v448 = vpack.c.b16 %v410, %v409
    %v449 = vpack.c.b16 %v412, %v411
    %v450 = vpack.c.b16 %v414, %v413
    %v451 = vpack.c.b16 %v416, %v415
    %v452 = vpack.c.b16 %v418, %v417
    %v453 = vpack.c.b16 %v420, %v419
    %v454 = vpack.c.b16 %v422, %v421
    %487 = vmatprep.subr.bf16.mxu0 0
    %488 = vmatpush1.bf16.msra.mxu0 %v423
    %489 = vmatprep.subr.bf16.mxu0 0
    %490 = vmatpush1.bf16.msra.mxu0 %v424
    %491 = vmatprep.subr.bf16.mxu0 0
    %492 = vmatpush1.bf16.msra.mxu0 %v425
    %493 = vmatprep.subr.bf16.mxu0 0
    %494 = vmatpush1.bf16.msra.mxu0 %v426
    %495 = vmatprep.subr.bf16.mxu0 0
    %496 = vmatpush1.bf16.msra.mxu0 %v427
    %497 = vmatprep.subr.bf16.mxu0 0
    %498 = vmatpush1.bf16.msra.mxu0 %v428
    %499 = vmatprep.subr.bf16.mxu0 0
    %500 = vmatpush1.bf16.msra.mxu0 %v429
    %501 = vmatprep.subr.bf16.mxu0 0
    %502 = vmatpush1.bf16.msra.mxu0 %v430
    %503 = vmatprep.subr.bf16.mxu0 0
    %504 = vmatpush1.bf16.msra.mxu0 %v431
    %505 = vmatprep.subr.bf16.mxu0 0
    %506 = vmatpush1.bf16.msra.mxu0 %v432
    %507 = vmatprep.subr.bf16.mxu0 0
    %508 = vmatpush1.bf16.msra.mxu0 %v433
    %509 = vmatprep.subr.bf16.mxu0 0
    %510 = vmatpush1.bf16.msra.mxu0 %v434
    %511 = vmatprep.subr.bf16.mxu0 0
    %512 = vmatpush1.bf16.msra.mxu0 %v435
    %513 = vmatprep.subr.bf16.mxu0 0
    %514 = vmatpush1.bf16.msra.mxu0 %v436
    %515 = vmatprep.subr.bf16.mxu0 0
    %516 = vmatpush1.bf16.msra.mxu0 %v437
    %517 = vmatprep.subr.bf16.mxu0 0
    %518 = vmatpush1.bf16.msra.mxu0 %v438
    %519 = vmatprep.mubr.bf16.mxu0 %v221
    %520 = vmatmul.mubr.bf16.gmra.mrb[0].mxu0 %v220
    %v521 = vpop.f32.mrb[0].mxu0
    %v522 = vadd.f32 %v293, %v521
    %v523 = vpop.f32.mrb[0].mxu0
    %v524 = vpop.f32.mrb[0].mxu0
    %v525 = vpop.f32.mrb[0].mxu0
    %526 = vdwg.mxu0
    %527 = vmatprep.subr.bf16.mxu0 0
    %528 = vmatpush1.bf16.msra.mxu0 %v439
    %529 = vmatprep.subr.bf16.mxu0 0
    %530 = vmatpush1.bf16.msra.mxu0 %v440
    %531 = vmatprep.subr.bf16.mxu0 0
    %532 = vmatpush1.bf16.msra.mxu0 %v441
    %533 = vmatprep.subr.bf16.mxu0 0
    %534 = vmatpush1.bf16.msra.mxu0 %v442
    %535 = vmatprep.subr.bf16.mxu0 0
    %536 = vmatpush1.bf16.msra.mxu0 %v443
    %537 = vmatprep.subr.bf16.mxu0 0
    %538 = vmatpush1.bf16.msra.mxu0 %v444
    %539 = vmatprep.subr.bf16.mxu0 0
    %540 = vmatpush1.bf16.msra.mxu0 %v445
    %541 = vmatprep.subr.bf16.mxu0 0
    %542 = vmatpush1.bf16.msra.mxu0 %v446
    %543 = vmatprep.subr.bf16.mxu0 0
    %544 = vmatpush1.bf16.msra.mxu0 %v447
    %545 = vmatprep.subr.bf16.mxu0 0
    %546 = vmatpush1.bf16.msra.mxu0 %v448
    %547 = vmatprep.subr.bf16.mxu0 0
    %548 = vmatpush1.bf16.msra.mxu0 %v449
    %549 = vmatprep.subr.bf16.mxu0 0
    %550 = vmatpush1.bf16.msra.mxu0 %v450
    %551 = vmatprep.subr.bf16.mxu0 0
    %552 = vmatpush1.bf16.msra.mxu0 %v451
    %553 = vmatprep.subr.bf16.mxu0 0
    %554 = vmatpush1.bf16.msra.mxu0 %v452
    %555 = vmatprep.subr.bf16.mxu0 0
    %556 = vmatpush1.bf16.msra.mxu0 %v453
    %557 = vmatprep.subr.bf16.mxu0 0
    %558 = vmatpush1.bf16.msra.mxu0 %v454
    %559 = vmatprep.mubr.bf16.mxu0 %v223
    %560 = vmatmul.mubr.bf16.gmra.mrb[0].mxu0 %v222
    %v561 = vpop.f32.mrb[0].mxu0
    %v562 = vadd.f32 %v522, %v561
    %v563 = vpop.f32.mrb[0].mxu0
    %v564 = vpop.f32.mrb[0].mxu0
    %v565 = vpop.f32.mrb[0].mxu0
    %566 = vdwg.mxu0
    %v567 = vxor.u32 %v562, 2147483648
    %v568 = vmul.f32 %v567, 1.442695
    %v569 = vpow.pop %v568
    %v570 = vadd.f32 %v569, 1.0
    %v571 = vrcp.pop %v570
    %v572 = vmul.f32 1.0, %v571
    %vm573 = vcmask 257024
    %v574 = vsel %vm573, %v572, 0.0
    %575 = vadd.xlane.f32.xlu0 %v574
    %v576 = vpop.xlane.xlu0 %575
    %vm577 = vcmask 1043456
    %v578 = vsel %vm577, %v576, 0.0
    %v579 = vrot.slane %v578, 4
    %v580 = vadd.f32 %v578, %v579
    %v581 = vrot.slane %v580, 2
    %v582 = vadd.f32 %v580, %v581
    %v583 = vrot.slane %v582, 1
    %v584 = vadd.f32 %v582, %v583
    %v585 = vmul.f32 %v584, 0.0078125
    %vm586 = vcmp.ge.f32.partialorder %v572, %v585
    %v587 = vsel %vm586, %v572, 0.0
    %589 = vrot.lane.b32.xlu0 %v587, 32
    %v590 = vpop.permute.xlu0 %589
    %v592 = vsel %vm130, %v572, %v590
    %vm593 = vcmask 519168
    %594 = vst.msk [vmem:[#allocation2] sm:$0xf] %vm593, %v592
    %v595 = vmul.f32 %v58, %v587
    %v596 = vlaneseq
    %v597 = vshrl.u32 %v596, 7
    %v598 = vsub.s32 0, %v597
    %v599 = vrot.slane %v595, %v598
    %601 = vbcast.lane.b32.xlu0 %v599, 256
    %v602 = vpop.permute.xlu0 %601
    %s604 = sor.u32 256, 8
    %605 = vbcast.lane.b32.xlu0 %v599, %s604
    %v606 = vpop.permute.xlu0 %605
    %s608 = sor.u32 256, 16
    %609 = vbcast.lane.b32.xlu0 %v599, %s608
    %v610 = vpop.permute.xlu0 %609
    %s612 = sor.u32 256, 24
    %613 = vbcast.lane.b32.xlu0 %v599, %s612
    %v614 = vpop.permute.xlu0 %613
    %v615 = vlaneseq
    %v616 = vshrl.u32 %v615, 7
    %v617 = vsub.s32 1, %v616
    %v618 = vrot.slane %v595, %v617
    %620 = vbcast.lane.b32.xlu0 %v618, 256
    %v621 = vpop.permute.xlu0 %620
    %s623 = sor.u32 256, 8
    %624 = vbcast.lane.b32.xlu0 %v618, %s623
    %v625 = vpop.permute.xlu0 %624
    %s627 = sor.u32 256, 16
    %628 = vbcast.lane.b32.xlu0 %v618, %s627
    %v629 = vpop.permute.xlu0 %628
    %s631 = sor.u32 256, 24
    %632 = vbcast.lane.b32.xlu0 %v618, %s631
    %v633 = vpop.permute.xlu0 %632
    %v634 = vlaneseq
    %v635 = vshrl.u32 %v634, 7
    %v636 = vsub.s32 2, %v635
    %v637 = vrot.slane %v595, %v636
    %639 = vbcast.lane.b32.xlu0 %v637, 256
    %v640 = vpop.permute.xlu0 %639
    %s642 = sor.u32 256, 8
    %643 = vbcast.lane.b32.xlu0 %v637, %s642
    %v644 = vpop.permute.xlu0 %643
    %s646 = sor.u32 256, 16
    %647 = vbcast.lane.b32.xlu0 %v637, %s646
    %v648 = vpop.permute.xlu0 %647
    %s650 = sor.u32 256, 24
    %651 = vbcast.lane.b32.xlu0 %v637, %s650
    %v652 = vpop.permute.xlu0 %651
    %v653 = vlaneseq
    %v654 = vshrl.u32 %v653, 7
    %v655 = vsub.s32 3, %v654
    %v656 = vrot.slane %v595, %v655
    %658 = vbcast.lane.b32.xlu0 %v656, 256
    %v659 = vpop.permute.xlu0 %658
    %s661 = sor.u32 256, 8
    %662 = vbcast.lane.b32.xlu0 %v656, %s661
    %v663 = vpop.permute.xlu0 %662
    %s665 = sor.u32 256, 16
    %666 = vbcast.lane.b32.xlu0 %v656, %s665
    %v667 = vpop.permute.xlu0 %666
    %s669 = sor.u32 256, 24
    %670 = vbcast.lane.b32.xlu0 %v656, %s669
    %v671 = vpop.permute.xlu0 %670
    %v672 = vlaneseq
    %v673 = vshrl.u32 %v672, 7
    %v674 = vadd.s32 %v673, 8
    %v675 = vadd.s32 %v673, 16
    %v676 = vadd.s32 %v673, 24
    %vm677 = vcmp.eq.s32.totalorder %v673, 0
    %vm678 = vcmp.eq.s32.totalorder %v674, 0
    %vm679 = vcmp.eq.s32.totalorder %v675, 0
    %vm680 = vcmp.eq.s32.totalorder %v676, 0
    %v681 = vrot.slane %v602, 7
    %v682 = vrot.slane %v621, 7
    %v683 = vrot.slane %v640, 7
    %v684 = vrot.slane %v659, 7
    %v685 = vrot.slane %v606, 7
    %v686 = vrot.slane %v625, 7
    %v687 = vrot.slane %v644, 7
    %v688 = vrot.slane %v663, 7
    %v689 = vrot.slane %v610, 7
    %v690 = vrot.slane %v629, 7
    %v691 = vrot.slane %v648, 7
    %v692 = vrot.slane %v667, 7
    %v693 = vrot.slane %v614, 7
    %v694 = vrot.slane %v633, 7
    %v695 = vrot.slane %v652, 7
    %v696 = vrot.slane %v671, 7
    %vm697 = vcmp.lt.s32.totalorder %v673, 1
    %v698 = vsel %vm697, %v689, %v693
    %v699 = vsel %vm697, %v690, %v694
    %v700 = vsel %vm697, %v691, %v695
    %v701 = vsel %vm697, %v692, %v696
    %v702 = vsel %vm697, %v685, %v689
    %v703 = vsel %vm697, %v686, %v690
    %v704 = vsel %vm697, %v687, %v691
    %v705 = vsel %vm697, %v688, %v692
    %v706 = vsel %vm697, %v681, %v685
    %v707 = vsel %vm697, %v682, %v686
    %v708 = vsel %vm697, %v683, %v687
    %v709 = vsel %vm697, %v684, %v688
    %v710 = vsel %vm697, %v693, %v681
    %v711 = vsel %vm697, %v694, %v682
    %v712 = vsel %vm697, %v695, %v683
    %v713 = vsel %vm697, %v696, %v684
    %v714 = vsel %vm677, 0.0, %v710
    %v715 = vsel %vm678, 0.0, %v706
    %v716 = vsel %vm679, 0.0, %v702
    %v717 = vsel %vm680, 0.0, %v698
    %v718 = vsel %vm677, 0.0, %v711
    %v719 = vsel %vm678, 0.0, %v707
    %v720 = vsel %vm679, 0.0, %v703
    %v721 = vsel %vm680, 0.0, %v699
    %v722 = vsel %vm677, 0.0, %v712
    %v723 = vsel %vm678, 0.0, %v708
    %v724 = vsel %vm679, 0.0, %v704
    %v725 = vsel %vm680, 0.0, %v700
    %v726 = vsel %vm677, 0.0, %v713
    %v727 = vsel %vm678, 0.0, %v709
    %v728 = vsel %vm679, 0.0, %v705
    %v729 = vsel %vm680, 0.0, %v701
    %vm730 = vcmp.eq.s32.totalorder %v673, 31
    %vm731 = vcmp.eq.s32.totalorder %v674, 31
    %vm732 = vcmp.eq.s32.totalorder %v675, 31
    %vm733 = vcmp.eq.s32.totalorder %v676, 31
    %v734 = vrot.slane %v602, 1
    %v735 = vrot.slane %v621, 1
    %v736 = vrot.slane %v640, 1
    %v737 = vrot.slane %v659, 1
    %v738 = vrot.slane %v606, 1
    %v739 = vrot.slane %v625, 1
    %v740 = vrot.slane %v644, 1
    %v741 = vrot.slane %v663, 1
    %v742 = vrot.slane %v610, 1
    %v743 = vrot.slane %v629, 1
    %v744 = vrot.slane %v648, 1
    %v745 = vrot.slane %v667, 1
    %v746 = vrot.slane %v614, 1
    %v747 = vrot.slane %v633, 1
    %v748 = vrot.slane %v652, 1
    %v749 = vrot.slane %v671, 1
    %vm750 = vcmp.lt.s32.totalorder %v673, 7
    %v751 = vsel %vm750, %v742, %v746
    %v752 = vsel %vm750, %v743, %v747
    %v753 = vsel %vm750, %v744, %v748
    %v754 = vsel %vm750, %v745, %v749
    %v755 = vsel %vm750, %v738, %v742
    %v756 = vsel %vm750, %v739, %v743
    %v757 = vsel %vm750, %v740, %v744
    %v758 = vsel %vm750, %v741, %v745
    %v759 = vsel %vm750, %v734, %v738
    %v760 = vsel %vm750, %v735, %v739
    %v761 = vsel %vm750, %v736, %v740
    %v762 = vsel %vm750, %v737, %v741
    %v763 = vsel %vm750, %v746, %v734
    %v764 = vsel %vm750, %v747, %v735
    %v765 = vsel %vm750, %v748, %v736
    %v766 = vsel %vm750, %v749, %v737
    %v767 = vsel %vm730, 0.0, %v759
    %v768 = vsel %vm731, 0.0, %v755
    %v769 = vsel %vm732, 0.0, %v751
    %v770 = vsel %vm733, 0.0, %v763
    %v771 = vsel %vm730, 0.0, %v760
    %v772 = vsel %vm731, 0.0, %v756
    %v773 = vsel %vm732, 0.0, %v752
    %v774 = vsel %vm733, 0.0, %v764
    %v775 = vsel %vm730, 0.0, %v761
    %v776 = vsel %vm731, 0.0, %v757
    %v777 = vsel %vm732, 0.0, %v753
    %v778 = vsel %vm733, 0.0, %v765
    %v779 = vsel %vm730, 0.0, %v762
    %v780 = vsel %vm731, 0.0, %v758
    %v781 = vsel %vm732, 0.0, %v754
    %v782 = vsel %vm733, 0.0, %v766
    %v783 = vld [vmem:[%s5] sm:$0x7]
    %785 = vset.pattern.permute.xlu0 0
    %786 = vperm.xlu0 %785, %v714
    %v787 = vpop.permute.xlu0 %786
    %790 = vset.pattern.permute.xlu0 0
    %791 = vperm.xlu0 %790, %v715
    %v792 = vpop.permute.xlu0 %791
    %795 = vset.pattern.permute.xlu0 0
    %796 = vperm.xlu0 %795, %v716
    %v797 = vpop.permute.xlu0 %796
    %800 = vset.pattern.permute.xlu0 0
    %801 = vperm.xlu0 %800, %v717
    %v802 = vpop.permute.xlu0 %801
    %805 = vset.pattern.permute.xlu0 0
    %806 = vperm.xlu0 %805, %v718
    %v807 = vpop.permute.xlu0 %806
    %810 = vset.pattern.permute.xlu0 0
    %811 = vperm.xlu0 %810, %v719
    %v812 = vpop.permute.xlu0 %811
    %815 = vset.pattern.permute.xlu0 0
    %816 = vperm.xlu0 %815, %v720
    %v817 = vpop.permute.xlu0 %816
    %820 = vset.pattern.permute.xlu0 0
    %821 = vperm.xlu0 %820, %v721
    %v822 = vpop.permute.xlu0 %821
    %825 = vset.pattern.permute.xlu0 0
    %826 = vperm.xlu0 %825, %v722
    %v827 = vpop.permute.xlu0 %826
    %830 = vset.pattern.permute.xlu0 0
    %831 = vperm.xlu0 %830, %v723
    %v832 = vpop.permute.xlu0 %831
    %835 = vset.pattern.permute.xlu0 0
    %836 = vperm.xlu0 %835, %v724
    %v837 = vpop.permute.xlu0 %836
    %840 = vset.pattern.permute.xlu0 0
    %841 = vperm.xlu0 %840, %v725
    %v842 = vpop.permute.xlu0 %841
    %845 = vset.pattern.permute.xlu0 0
    %846 = vperm.xlu0 %845, %v726
    %v847 = vpop.permute.xlu0 %846
    %850 = vset.pattern.permute.xlu0 0
    %851 = vperm.xlu0 %850, %v727
    %v852 = vpop.permute.xlu0 %851
    %855 = vset.pattern.permute.xlu0 0
    %856 = vperm.xlu0 %855, %v728
    %v857 = vpop.permute.xlu0 %856
    %860 = vset.pattern.permute.xlu0 0
    %861 = vperm.xlu0 %860, %v729
    %v862 = vpop.permute.xlu0 %861
    %v864 = vlaneseq
    %v865 = vshrl.u32 %v864, 7
    %v866 = vsub.s32 0, %v865
    %v867 = vrot.slane %v783, %v866
    %v868 = vmul.f32 %v787, %v867
    %v869 = vmul.f32 %v792, %v867
    %v870 = vmul.f32 %v797, %v867
    %v871 = vmul.f32 %v802, %v867
    %v872 = vmul.f32 %v807, %v867
    %v873 = vmul.f32 %v812, %v867
    %v874 = vmul.f32 %v817, %v867
    %v875 = vmul.f32 %v822, %v867
    %v876 = vmul.f32 %v827, %v867
    %v877 = vmul.f32 %v832, %v867
    %v878 = vmul.f32 %v837, %v867
    %v879 = vmul.f32 %v842, %v867
    %v880 = vmul.f32 %v847, %v867
    %v881 = vmul.f32 %v852, %v867
    %v882 = vmul.f32 %v857, %v867
    %v883 = vmul.f32 %v862, %v867
    %v884 = vlaneseq
    %v885 = vshrl.u32 %v884, 7
    %v886 = vsub.s32 1, %v885
    %v887 = vrot.slane %v783, %v886
    %v888 = vmul.f32 %v602, %v887
    %v889 = vmul.f32 %v606, %v887
    %v890 = vmul.f32 %v610, %v887
    %v891 = vmul.f32 %v614, %v887
    %v892 = vmul.f32 %v621, %v887
    %v893 = vmul.f32 %v625, %v887
    %v894 = vmul.f32 %v629, %v887
    %v895 = vmul.f32 %v633, %v887
    %v896 = vmul.f32 %v640, %v887
    %v897 = vmul.f32 %v644, %v887
    %v898 = vmul.f32 %v648, %v887
    %v899 = vmul.f32 %v652, %v887
    %v900 = vmul.f32 %v659, %v887
    %v901 = vmul.f32 %v663, %v887
    %v902 = vmul.f32 %v667, %v887
    %v903 = vmul.f32 %v671, %v887
    %v904 = vadd.f32 %v868, %v888
    %v905 = vadd.f32 %v869, %v889
    %v906 = vadd.f32 %v870, %v890
    %v907 = vadd.f32 %v871, %v891
    %v908 = vadd.f32 %v872, %v892
    %v909 = vadd.f32 %v873, %v893
    %v910 = vadd.f32 %v874, %v894
    %v911 = vadd.f32 %v875, %v895
    %v912 = vadd.f32 %v876, %v896
    %v913 = vadd.f32 %v877, %v897
    %v914 = vadd.f32 %v878, %v898
    %v915 = vadd.f32 %v879, %v899
    %v916 = vadd.f32 %v880, %v900
    %v917 = vadd.f32 %v881, %v901
    %v918 = vadd.f32 %v882, %v902
    %v919 = vadd.f32 %v883, %v903
    %921 = vset.pattern.permute.xlu0 0
    %922 = vperm.xlu0 %921, %v767
    %v923 = vpop.permute.xlu0 %922
    %926 = vset.pattern.permute.xlu0 0
    %927 = vperm.xlu0 %926, %v768
    %v928 = vpop.permute.xlu0 %927
    %931 = vset.pattern.permute.xlu0 0
    %932 = vperm.xlu0 %931, %v769
    %v933 = vpop.permute.xlu0 %932
    %936 = vset.pattern.permute.xlu0 0
    %937 = vperm.xlu0 %936, %v770
    %v938 = vpop.permute.xlu0 %937
    %941 = vset.pattern.permute.xlu0 0
    %942 = vperm.xlu0 %941, %v771
    %v943 = vpop.permute.xlu0 %942
    %946 = vset.pattern.permute.xlu0 0
    %947 = vperm.xlu0 %946, %v772
    %v948 = vpop.permute.xlu0 %947
    %951 = vset.pattern.permute.xlu0 0
    %952 = vperm.xlu0 %951, %v773
    %v953 = vpop.permute.xlu0 %952
    %956 = vset.pattern.permute.xlu0 0
    %957 = vperm.xlu0 %956, %v774
    %v958 = vpop.permute.xlu0 %957
    %961 = vset.pattern.permute.xlu0 0
    %962 = vperm.xlu0 %961, %v775
    %v963 = vpop.permute.xlu0 %962
    %966 = vset.pattern.permute.xlu0 0
    %967 = vperm.xlu0 %966, %v776
    %v968 = vpop.permute.xlu0 %967
    %971 = vset.pattern.permute.xlu0 0
    %972 = vperm.xlu0 %971, %v777
    %v973 = vpop.permute.xlu0 %972
    %976 = vset.pattern.permute.xlu0 0
    %977 = vperm.xlu0 %976, %v778
    %v978 = vpop.permute.xlu0 %977
    %981 = vset.pattern.permute.xlu0 0
    %982 = vperm.xlu0 %981, %v779
    %v983 = vpop.permute.xlu0 %982
    %986 = vset.pattern.permute.xlu0 0
    %987 = vperm.xlu0 %986, %v780
    %v988 = vpop.permute.xlu0 %987
    %991 = vset.pattern.permute.xlu0 0
    %992 = vperm.xlu0 %991, %v781
    %v993 = vpop.permute.xlu0 %992
    %996 = vset.pattern.permute.xlu0 0
    %997 = vperm.xlu0 %996, %v782
    %v998 = vpop.permute.xlu0 %997
    %v1000 = vlaneseq
    %v1001 = vshrl.u32 %v1000, 7
    %v1002 = vsub.s32 2, %v1001
    %v1003 = vrot.slane %v783, %v1002
    %v1004 = vmul.f32 %v923, %v1003
    %v1005 = vmul.f32 %v928, %v1003
    %v1006 = vmul.f32 %v933, %v1003
    %v1007 = vmul.f32 %v938, %v1003
    %v1008 = vmul.f32 %v943, %v1003
    %v1009 = vmul.f32 %v948, %v1003
    %v1010 = vmul.f32 %v953, %v1003
    %v1011 = vmul.f32 %v958, %v1003
    %v1012 = vmul.f32 %v963, %v1003
    %v1013 = vmul.f32 %v968, %v1003
    %v1014 = vmul.f32 %v973, %v1003
    %v1015 = vmul.f32 %v978, %v1003
    %v1016 = vmul.f32 %v983, %v1003
    %v1017 = vmul.f32 %v988, %v1003
    %v1018 = vmul.f32 %v993, %v1003
    %v1019 = vmul.f32 %v998, %v1003
    %v1020 = vadd.f32 %v904, %v1004
    %v1021 = vadd.f32 %v905, %v1005
    %v1022 = vadd.f32 %v906, %v1006
    %v1023 = vadd.f32 %v907, %v1007
    %v1024 = vadd.f32 %v908, %v1008
    %v1025 = vadd.f32 %v909, %v1009
    %v1026 = vadd.f32 %v910, %v1010
    %v1027 = vadd.f32 %v911, %v1011
    %v1028 = vadd.f32 %v912, %v1012
    %v1029 = vadd.f32 %v913, %v1013
    %v1030 = vadd.f32 %v914, %v1014
    %v1031 = vadd.f32 %v915, %v1015
    %v1032 = vadd.f32 %v916, %v1016
    %v1033 = vadd.f32 %v917, %v1017
    %v1034 = vadd.f32 %v918, %v1018
    %v1035 = vadd.f32 %v919, %v1019
    %v1036 = vld [vmem:[%s6] sm:$0x1]
    %v1037 = vld [vmem:[%s7] sm:$0x1]
    %v1039 = vlaneseq
    %v1040 = vshrl.u32 %v1039, 7
    %v1041 = vsub.s32 0, %v1040
    %v1042 = vrot.slane %v1036, %v1041
    %v1044 = vmul.f32 %v1020, %v1042
    %v1045 = vmul.f32 %v1021, %v1042
    %v1046 = vmul.f32 %v1022, %v1042
    %v1047 = vmul.f32 %v1023, %v1042
    %v1048 = vmul.f32 %v1024, %v1042
    %v1049 = vmul.f32 %v1025, %v1042
    %v1050 = vmul.f32 %v1026, %v1042
    %v1051 = vmul.f32 %v1027, %v1042
    %v1052 = vmul.f32 %v1028, %v1042
    %v1053 = vmul.f32 %v1029, %v1042
    %v1054 = vmul.f32 %v1030, %v1042
    %v1055 = vmul.f32 %v1031, %v1042
    %v1056 = vmul.f32 %v1032, %v1042
    %v1057 = vmul.f32 %v1033, %v1042
    %v1058 = vmul.f32 %v1034, %v1042
    %v1059 = vmul.f32 %v1035, %v1042
    %v1061 = vlaneseq
    %v1062 = vshrl.u32 %v1061, 7
    %v1063 = vsub.s32 0, %v1062
    %v1064 = vrot.slane %v1037, %v1063
    %v1066 = vadd.f32 %v1044, %v1064
    %v1067 = vadd.f32 %v1045, %v1064
    %v1068 = vadd.f32 %v1046, %v1064
    %v1069 = vadd.f32 %v1047, %v1064
    %v1070 = vadd.f32 %v1048, %v1064
    %v1071 = vadd.f32 %v1049, %v1064
    %v1072 = vadd.f32 %v1050, %v1064
    %v1073 = vadd.f32 %v1051, %v1064
    %v1074 = vadd.f32 %v1052, %v1064
    %v1075 = vadd.f32 %v1053, %v1064
    %v1076 = vadd.f32 %v1054, %v1064
    %v1077 = vadd.f32 %v1055, %v1064
    %v1078 = vadd.f32 %v1056, %v1064
    %v1079 = vadd.f32 %v1057, %v1064
    %v1080 = vadd.f32 %v1058, %v1064
    %v1081 = vadd.f32 %v1059, %v1064
    %v1082 = vmax.f32 %v1066, 0.0
    %v1083 = vmax.f32 %v1067, 0.0
    %v1084 = vmax.f32 %v1068, 0.0
    %v1085 = vmax.f32 %v1069, 0.0
    %v1086 = vmax.f32 %v1070, 0.0
    %v1087 = vmax.f32 %v1071, 0.0
    %v1088 = vmax.f32 %v1072, 0.0
    %v1089 = vmax.f32 %v1073, 0.0
    %v1090 = vmax.f32 %v1074, 0.0
    %v1091 = vmax.f32 %v1075, 0.0
    %v1092 = vmax.f32 %v1076, 0.0
    %v1093 = vmax.f32 %v1077, 0.0
    %v1094 = vmax.f32 %v1078, 0.0
    %v1095 = vmax.f32 %v1079, 0.0
    %v1096 = vmax.f32 %v1080, 0.0
    %v1097 = vmax.f32 %v1081, 0.0
    %v1114 = vcombine.high %v1082, %v1082
    %v1116 = vunpack.c.l.s4 1983009808
    %v1117 = vunpack.c.0.s8 %v1116
    %v1118 = vlaneseq
    %v1119 = vshrl.u32 %v1118, 7
    %v1120 = vsub.s32 %v1117, %v1119
    %v1121 = vrot.slane %v1082, %v1120
    %v1123 = vunpack.c.l.s4 1983009808
    %v1124 = vunpack.c.0.s8 %v1123
    %v1125 = vlaneseq
    %v1126 = vshrl.u32 %v1125, 7
    %v1127 = vsub.s32 %v1124, %v1126
    %v1128 = vrot.slane %v1114, %v1127
    %v1129 = vcombine.high %v1121, %v1121
    %v1130 = vcombine.high %v1128, %v1128
    %v1131 = vcombine.high %v1083, %v1083
    %v1133 = vunpack.c.l.s4 1983009808
    %v1134 = vunpack.c.0.s8 %v1133
    %v1135 = vlaneseq
    %v1136 = vshrl.u32 %v1135, 7
    %v1137 = vsub.s32 %v1134, %v1136
    %v1138 = vrot.slane %v1083, %v1137
    %v1140 = vunpack.c.l.s4 1983009808
    %v1141 = vunpack.c.0.s8 %v1140
    %v1142 = vlaneseq
    %v1143 = vshrl.u32 %v1142, 7
    %v1144 = vsub.s32 %v1141, %v1143
    %v1145 = vrot.slane %v1131, %v1144
    %v1146 = vcombine.high %v1138, %v1138
    %v1147 = vcombine.high %v1145, %v1145
    %v1148 = vcombine.high %v1084, %v1084
    %v1150 = vunpack.c.l.s4 1983009808
    %v1151 = vunpack.c.0.s8 %v1150
    %v1152 = vlaneseq
    %v1153 = vshrl.u32 %v1152, 7
    %v1154 = vsub.s32 %v1151, %v1153
    %v1155 = vrot.slane %v1084, %v1154
    %v1157 = vunpack.c.l.s4 1983009808
    %v1158 = vunpack.c.0.s8 %v1157
    %v1159 = vlaneseq
    %v1160 = vshrl.u32 %v1159, 7
    %v1161 = vsub.s32 %v1158, %v1160
    %v1162 = vrot.slane %v1148, %v1161
    %v1163 = vcombine.high %v1155, %v1155
    %v1164 = vcombine.high %v1162, %v1162
    %v1165 = vcombine.high %v1085, %v1085
    %v1167 = vunpack.c.l.s4 1983009808
    %v1168 = vunpack.c.0.s8 %v1167
    %v1169 = vlaneseq
    %v1170 = vshrl.u32 %v1169, 7
    %v1171 = vsub.s32 %v1168, %v1170
    %v1172 = vrot.slane %v1085, %v1171
    %v1174 = vunpack.c.l.s4 1983009808
    %v1175 = vunpack.c.0.s8 %v1174
    %v1176 = vlaneseq
    %v1177 = vshrl.u32 %v1176, 7
    %v1178 = vsub.s32 %v1175, %v1177
    %v1179 = vrot.slane %v1165, %v1178
    %v1180 = vcombine.high %v1172, %v1172
    %v1181 = vcombine.high %v1179, %v1179
    %v1182 = vcombine.high %v1086, %v1086
    %v1184 = vunpack.c.l.s4 1983009808
    %v1185 = vunpack.c.0.s8 %v1184
    %v1186 = vlaneseq
    %v1187 = vshrl.u32 %v1186, 7
    %v1188 = vsub.s32 %v1185, %v1187
    %v1189 = vrot.slane %v1086, %v1188
    %v1191 = vunpack.c.l.s4 1983009808
    %v1192 = vunpack.c.0.s8 %v1191
    %v1193 = vlaneseq
    %v1194 = vshrl.u32 %v1193, 7
    %v1195 = vsub.s32 %v1192, %v1194
    %v1196 = vrot.slane %v1182, %v1195
    %v1197 = vcombine.high %v1189, %v1189
    %v1198 = vcombine.high %v1196, %v1196
    %v1199 = vcombine.high %v1087, %v1087
    %v1201 = vunpack.c.l.s4 1983009808
    %v1202 = vunpack.c.0.s8 %v1201
    %v1203 = vlaneseq
    %v1204 = vshrl.u32 %v1203, 7
    %v1205 = vsub.s32 %v1202, %v1204
    %v1206 = vrot.slane %v1087, %v1205
    %v1208 = vunpack.c.l.s4 1983009808
    %v1209 = vunpack.c.0.s8 %v1208
    %v1210 = vlaneseq
    %v1211 = vshrl.u32 %v1210, 7
    %v1212 = vsub.s32 %v1209, %v1211
    %v1213 = vrot.slane %v1199, %v1212
    %v1214 = vcombine.high %v1206, %v1206
    %v1215 = vcombine.high %v1213, %v1213
    %v1216 = vcombine.high %v1088, %v1088
    %v1218 = vunpack.c.l.s4 1983009808
    %v1219 = vunpack.c.0.s8 %v1218
    %v1220 = vlaneseq
    %v1221 = vshrl.u32 %v1220, 7
    %v1222 = vsub.s32 %v1219, %v1221
    %v1223 = vrot.slane %v1088, %v1222
    %v1225 = vunpack.c.l.s4 1983009808
    %v1226 = vunpack.c.0.s8 %v1225
    %v1227 = vlaneseq
    %v1228 = vshrl.u32 %v1227, 7
    %v1229 = vsub.s32 %v1226, %v1228
    %v1230 = vrot.slane %v1216, %v1229
    %v1231 = vcombine.high %v1223, %v1223
    %v1232 = vcombine.high %v1230, %v1230
    %v1233 = vcombine.high %v1089, %v1089
    %v1235 = vunpack.c.l.s4 1983009808
    %v1236 = vunpack.c.0.s8 %v1235
    %v1237 = vlaneseq
    %v1238 = vshrl.u32 %v1237, 7
    %v1239 = vsub.s32 %v1236, %v1238
    %v1240 = vrot.slane %v1089, %v1239
    %v1242 = vunpack.c.l.s4 1983009808
    %v1243 = vunpack.c.0.s8 %v1242
    %v1244 = vlaneseq
    %v1245 = vshrl.u32 %v1244, 7
    %v1246 = vsub.s32 %v1243, %v1245
    %v1247 = vrot.slane %v1233, %v1246
    %v1248 = vcombine.high %v1240, %v1240
    %v1249 = vcombine.high %v1247, %v1247
    %v1250 = vcombine.high %v1090, %v1090
    %v1252 = vunpack.c.l.s4 1983009808
    %v1253 = vunpack.c.0.s8 %v1252
    %v1254 = vlaneseq
    %v1255 = vshrl.u32 %v1254, 7
    %v1256 = vsub.s32 %v1253, %v1255
    %v1257 = vrot.slane %v1090, %v1256
    %v1259 = vunpack.c.l.s4 1983009808
    %v1260 = vunpack.c.0.s8 %v1259
    %v1261 = vlaneseq
    %v1262 = vshrl.u32 %v1261, 7
    %v1263 = vsub.s32 %v1260, %v1262
    %v1264 = vrot.slane %v1250, %v1263
    %v1265 = vcombine.high %v1257, %v1257
    %v1266 = vcombine.high %v1264, %v1264
    %v1267 = vcombine.high %v1091, %v1091
    %v1269 = vunpack.c.l.s4 1983009808
    %v1270 = vunpack.c.0.s8 %v1269
    %v1271 = vlaneseq
    %v1272 = vshrl.u32 %v1271, 7
    %v1273 = vsub.s32 %v1270, %v1272
    %v1274 = vrot.slane %v1091, %v1273
    %v1276 = vunpack.c.l.s4 1983009808
    %v1277 = vunpack.c.0.s8 %v1276
    %v1278 = vlaneseq
    %v1279 = vshrl.u32 %v1278, 7
    %v1280 = vsub.s32 %v1277, %v1279
    %v1281 = vrot.slane %v1267, %v1280
    %v1282 = vcombine.high %v1274, %v1274
    %v1283 = vcombine.high %v1281, %v1281
    %v1284 = vcombine.high %v1092, %v1092
    %v1286 = vunpack.c.l.s4 1983009808
    %v1287 = vunpack.c.0.s8 %v1286
    %v1288 = vlaneseq
    %v1289 = vshrl.u32 %v1288, 7
    %v1290 = vsub.s32 %v1287, %v1289
    %v1291 = vrot.slane %v1092, %v1290
    %v1293 = vunpack.c.l.s4 1983009808
    %v1294 = vunpack.c.0.s8 %v1293
    %v1295 = vlaneseq
    %v1296 = vshrl.u32 %v1295, 7
    %v1297 = vsub.s32 %v1294, %v1296
    %v1298 = vrot.slane %v1284, %v1297
    %v1299 = vcombine.high %v1291, %v1291
    %v1300 = vcombine.high %v1298, %v1298
    %v1301 = vcombine.high %v1093, %v1093
    %v1303 = vunpack.c.l.s4 1983009808
    %v1304 = vunpack.c.0.s8 %v1303
    %v1305 = vlaneseq
    %v1306 = vshrl.u32 %v1305, 7
    %v1307 = vsub.s32 %v1304, %v1306
    %v1308 = vrot.slane %v1093, %v1307
    %v1310 = vunpack.c.l.s4 1983009808
    %v1311 = vunpack.c.0.s8 %v1310
    %v1312 = vlaneseq
    %v1313 = vshrl.u32 %v1312, 7
    %v1314 = vsub.s32 %v1311, %v1313
    %v1315 = vrot.slane %v1301, %v1314
    %v1316 = vcombine.high %v1308, %v1308
    %v1317 = vcombine.high %v1315, %v1315
    %v1318 = vcombine.high %v1094, %v1094
    %v1320 = vunpack.c.l.s4 1983009808
    %v1321 = vunpack.c.0.s8 %v1320
    %v1322 = vlaneseq
    %v1323 = vshrl.u32 %v1322, 7
    %v1324 = vsub.s32 %v1321, %v1323
    %v1325 = vrot.slane %v1094, %v1324
    %v1327 = vunpack.c.l.s4 1983009808
    %v1328 = vunpack.c.0.s8 %v1327
    %v1329 = vlaneseq
    %v1330 = vshrl.u32 %v1329, 7
    %v1331 = vsub.s32 %v1328, %v1330
    %v1332 = vrot.slane %v1318, %v1331
    %v1333 = vcombine.high %v1325, %v1325
    %v1334 = vcombine.high %v1332, %v1332
    %v1335 = vcombine.high %v1095, %v1095
    %v1337 = vunpack.c.l.s4 1983009808
    %v1338 = vunpack.c.0.s8 %v1337
    %v1339 = vlaneseq
    %v1340 = vshrl.u32 %v1339, 7
    %v1341 = vsub.s32 %v1338, %v1340
    %v1342 = vrot.slane %v1095, %v1341
    %v1344 = vunpack.c.l.s4 1983009808
    %v1345 = vunpack.c.0.s8 %v1344
    %v1346 = vlaneseq
    %v1347 = vshrl.u32 %v1346, 7
    %v1348 = vsub.s32 %v1345, %v1347
    %v1349 = vrot.slane %v1335, %v1348
    %v1350 = vcombine.high %v1342, %v1342
    %v1351 = vcombine.high %v1349, %v1349
    %v1352 = vcombine.high %v1096, %v1096
    %v1354 = vunpack.c.l.s4 1983009808
    %v1355 = vunpack.c.0.s8 %v1354
    %v1356 = vlaneseq
    %v1357 = vshrl.u32 %v1356, 7
    %v1358 = vsub.s32 %v1355, %v1357
    %v1359 = vrot.slane %v1096, %v1358
    %v1361 = vunpack.c.l.s4 1983009808
    %v1362 = vunpack.c.0.s8 %v1361
    %v1363 = vlaneseq
    %v1364 = vshrl.u32 %v1363, 7
    %v1365 = vsub.s32 %v1362, %v1364
    %v1366 = vrot.slane %v1352, %v1365
    %v1367 = vcombine.high %v1359, %v1359
    %v1368 = vcombine.high %v1366, %v1366
    %v1369 = vcombine.high %v1097, %v1097
    %v1371 = vunpack.c.l.s4 1983009808
    %v1372 = vunpack.c.0.s8 %v1371
    %v1373 = vlaneseq
    %v1374 = vshrl.u32 %v1373, 7
    %v1375 = vsub.s32 %v1372, %v1374
    %v1376 = vrot.slane %v1097, %v1375
    %v1378 = vunpack.c.l.s4 1983009808
    %v1379 = vunpack.c.0.s8 %v1378
    %v1380 = vlaneseq
    %v1381 = vshrl.u32 %v1380, 7
    %v1382 = vsub.s32 %v1379, %v1381
    %v1383 = vrot.slane %v1369, %v1382
    %v1384 = vcombine.high %v1376, %v1376
    %v1385 = vcombine.high %v1383, %v1383
    %vm1450 = vcmask 123904
    %v1451 = vsel %vm1450, %v1121, -inf
    %v1452 = vrot.slane %v1451, 4
    %v1453 = vmax.f32 %v1451, %v1452
    %v1454 = vrot.slane %v1453, 2
    %v1455 = vmax.f32 %v1453, %v1454
    %v1456 = vrot.slane %v1455, 1
    %v1457 = vmax.f32 %v1455, %v1456
    %v1458 = vsel %vm1450, %v1129, -inf
    %v1459 = vrot.slane %v1458, 4
    %v1460 = vmax.f32 %v1458, %v1459
    %v1461 = vrot.slane %v1460, 2
    %v1462 = vmax.f32 %v1460, %v1461
    %v1463 = vrot.slane %v1462, 1
    %v1464 = vmax.f32 %v1462, %v1463
    %v1465 = vsel %vm1450, %v1128, -inf
    %v1466 = vrot.slane %v1465, 4
    %v1467 = vmax.f32 %v1465, %v1466
    %v1468 = vrot.slane %v1467, 2
    %v1469 = vmax.f32 %v1467, %v1468
    %v1470 = vrot.slane %v1469, 1
    %v1471 = vmax.f32 %v1469, %v1470
    %v1472 = vsel %vm1450, %v1130, -inf
    %v1473 = vrot.slane %v1472, 4
    %v1474 = vmax.f32 %v1472, %v1473
    %v1475 = vrot.slane %v1474, 2
    %v1476 = vmax.f32 %v1474, %v1475
    %v1477 = vrot.slane %v1476, 1
    %v1478 = vmax.f32 %v1476, %v1477
    %v1479 = vsel %vm1450, %v1138, -inf
    %v1480 = vrot.slane %v1479, 4
    %v1481 = vmax.f32 %v1479, %v1480
    %v1482 = vrot.slane %v1481, 2
    %v1483 = vmax.f32 %v1481, %v1482
    %v1484 = vrot.slane %v1483, 1
    %v1485 = vmax.f32 %v1483, %v1484
    %v1486 = vsel %vm1450, %v1146, -inf
    %v1487 = vrot.slane %v1486, 4
    %v1488 = vmax.f32 %v1486, %v1487
    %v1489 = vrot.slane %v1488, 2
    %v1490 = vmax.f32 %v1488, %v1489
    %v1491 = vrot.slane %v1490, 1
    %v1492 = vmax.f32 %v1490, %v1491
    %v1493 = vsel %vm1450, %v1145, -inf
    %v1494 = vrot.slane %v1493, 4
    %v1495 = vmax.f32 %v1493, %v1494
    %v1496 = vrot.slane %v1495, 2
    %v1497 = vmax.f32 %v1495, %v1496
    %v1498 = vrot.slane %v1497, 1
    %v1499 = vmax.f32 %v1497, %v1498
    %v1500 = vsel %vm1450, %v1147, -inf
    %v1501 = vrot.slane %v1500, 4
    %v1502 = vmax.f32 %v1500, %v1501
    %v1503 = vrot.slane %v1502, 2
    %v1504 = vmax.f32 %v1502, %v1503
    %v1505 = vrot.slane %v1504, 1
    %v1506 = vmax.f32 %v1504, %v1505
    %v1507 = vsel %vm1450, %v1155, -inf
    %v1508 = vrot.slane %v1507, 4
    %v1509 = vmax.f32 %v1507, %v1508
    %v1510 = vrot.slane %v1509, 2
    %v1511 = vmax.f32 %v1509, %v1510
    %v1512 = vrot.slane %v1511, 1
    %v1513 = vmax.f32 %v1511, %v1512
    %v1514 = vsel %vm1450, %v1163, -inf
    %v1515 = vrot.slane %v1514, 4
    %v1516 = vmax.f32 %v1514, %v1515
    %v1517 = vrot.slane %v1516, 2
    %v1518 = vmax.f32 %v1516, %v1517
    %v1519 = vrot.slane %v1518, 1
    %v1520 = vmax.f32 %v1518, %v1519
    %v1521 = vsel %vm1450, %v1162, -inf
    %v1522 = vrot.slane %v1521, 4
    %v1523 = vmax.f32 %v1521, %v1522
    %v1524 = vrot.slane %v1523, 2
    %v1525 = vmax.f32 %v1523, %v1524
    %v1526 = vrot.slane %v1525, 1
    %v1527 = vmax.f32 %v1525, %v1526
    %v1528 = vsel %vm1450, %v1164, -inf
    %v1529 = vrot.slane %v1528, 4
    %v1530 = vmax.f32 %v1528, %v1529
    %v1531 = vrot.slane %v1530, 2
    %v1532 = vmax.f32 %v1530, %v1531
    %v1533 = vrot.slane %v1532, 1
    %v1534 = vmax.f32 %v1532, %v1533
    %v1535 = vsel %vm1450, %v1172, -inf
    %v1536 = vrot.slane %v1535, 4
    %v1537 = vmax.f32 %v1535, %v1536
    %v1538 = vrot.slane %v1537, 2
    %v1539 = vmax.f32 %v1537, %v1538
    %v1540 = vrot.slane %v1539, 1
    %v1541 = vmax.f32 %v1539, %v1540
    %v1542 = vsel %vm1450, %v1180, -inf
    %v1543 = vrot.slane %v1542, 4
    %v1544 = vmax.f32 %v1542, %v1543
    %v1545 = vrot.slane %v1544, 2
    %v1546 = vmax.f32 %v1544, %v1545
    %v1547 = vrot.slane %v1546, 1
    %v1548 = vmax.f32 %v1546, %v1547
    %v1549 = vsel %vm1450, %v1179, -inf
    %v1550 = vrot.slane %v1549, 4
    %v1551 = vmax.f32 %v1549, %v1550
    %v1552 = vrot.slane %v1551, 2
    %v1553 = vmax.f32 %v1551, %v1552
    %v1554 = vrot.slane %v1553, 1
    %v1555 = vmax.f32 %v1553, %v1554
    %v1556 = vsel %vm1450, %v1181, -inf
    %v1557 = vrot.slane %v1556, 4
    %v1558 = vmax.f32 %v1556, %v1557
    %v1559 = vrot.slane %v1558, 2
    %v1560 = vmax.f32 %v1558, %v1559
    %v1561 = vrot.slane %v1560, 1
    %v1562 = vmax.f32 %v1560, %v1561
    %v1563 = vsel %vm1450, %v1189, -inf
    %v1564 = vrot.slane %v1563, 4
    %v1565 = vmax.f32 %v1563, %v1564
    %v1566 = vrot.slane %v1565, 2
    %v1567 = vmax.f32 %v1565, %v1566
    %v1568 = vrot.slane %v1567, 1
    %v1569 = vmax.f32 %v1567, %v1568
    %v1570 = vsel %vm1450, %v1197, -inf
    %v1571 = vrot.slane %v1570, 4
    %v1572 = vmax.f32 %v1570, %v1571
    %v1573 = vrot.slane %v1572, 2
    %v1574 = vmax.f32 %v1572, %v1573
    %v1575 = vrot.slane %v1574, 1
    %v1576 = vmax.f32 %v1574, %v1575
    %v1577 = vsel %vm1450, %v1196, -inf
    %v1578 = vrot.slane %v1577, 4
    %v1579 = vmax.f32 %v1577, %v1578
    %v1580 = vrot.slane %v1579, 2
    %v1581 = vmax.f32 %v1579, %v1580
    %v1582 = vrot.slane %v1581, 1
    %v1583 = vmax.f32 %v1581, %v1582
    %v1584 = vsel %vm1450, %v1198, -inf
    %v1585 = vrot.slane %v1584, 4
    %v1586 = vmax.f32 %v1584, %v1585
    %v1587 = vrot.slane %v1586, 2
    %v1588 = vmax.f32 %v1586, %v1587
    %v1589 = vrot.slane %v1588, 1
    %v1590 = vmax.f32 %v1588, %v1589
    %v1591 = vsel %vm1450, %v1206, -inf
    %v1592 = vrot.slane %v1591, 4
    %v1593 = vmax.f32 %v1591, %v1592
    %v1594 = vrot.slane %v1593, 2
    %v1595 = vmax.f32 %v1593, %v1594
    %v1596 = vrot.slane %v1595, 1
    %v1597 = vmax.f32 %v1595, %v1596
    %v1598 = vsel %vm1450, %v1214, -inf
    %v1599 = vrot.slane %v1598, 4
    %v1600 = vmax.f32 %v1598, %v1599
    %v1601 = vrot.slane %v1600, 2
    %v1602 = vmax.f32 %v1600, %v1601
    %v1603 = vrot.slane %v1602, 1
    %v1604 = vmax.f32 %v1602, %v1603
    %v1605 = vsel %vm1450, %v1213, -inf
    %v1606 = vrot.slane %v1605, 4
    %v1607 = vmax.f32 %v1605, %v1606
    %v1608 = vrot.slane %v1607, 2
    %v1609 = vmax.f32 %v1607, %v1608
    %v1610 = vrot.slane %v1609, 1
    %v1611 = vmax.f32 %v1609, %v1610
    %v1612 = vsel %vm1450, %v1215, -inf
    %v1613 = vrot.slane %v1612, 4
    %v1614 = vmax.f32 %v1612, %v1613
    %v1615 = vrot.slane %v1614, 2
    %v1616 = vmax.f32 %v1614, %v1615
    %v1617 = vrot.slane %v1616, 1
    %v1618 = vmax.f32 %v1616, %v1617
    %v1619 = vsel %vm1450, %v1223, -inf
    %v1620 = vrot.slane %v1619, 4
    %v1621 = vmax.f32 %v1619, %v1620
    %v1622 = vrot.slane %v1621, 2
    %v1623 = vmax.f32 %v1621, %v1622
    %v1624 = vrot.slane %v1623, 1
    %v1625 = vmax.f32 %v1623, %v1624
    %v1626 = vsel %vm1450, %v1231, -inf
    %v1627 = vrot.slane %v1626, 4
    %v1628 = vmax.f32 %v1626, %v1627
    %v1629 = vrot.slane %v1628, 2
    %v1630 = vmax.f32 %v1628, %v1629
    %v1631 = vrot.slane %v1630, 1
    %v1632 = vmax.f32 %v1630, %v1631
    %v1633 = vsel %vm1450, %v1230, -inf
    %v1634 = vrot.slane %v1633, 4
    %v1635 = vmax.f32 %v1633, %v1634
    %v1636 = vrot.slane %v1635, 2
    %v1637 = vmax.f32 %v1635, %v1636
    %v1638 = vrot.slane %v1637, 1
    %v1639 = vmax.f32 %v1637, %v1638
    %v1640 = vsel %vm1450, %v1232, -inf
    %v1641 = vrot.slane %v1640, 4
    %v1642 = vmax.f32 %v1640, %v1641
    %v1643 = vrot.slane %v1642, 2
    %v1644 = vmax.f32 %v1642, %v1643
    %v1645 = vrot.slane %v1644, 1
    %v1646 = vmax.f32 %v1644, %v1645
    %v1647 = vsel %vm1450, %v1240, -inf
    %v1648 = vrot.slane %v1647, 4
    %v1649 = vmax.f32 %v1647, %v1648
    %v1650 = vrot.slane %v1649, 2
    %v1651 = vmax.f32 %v1649, %v1650
    %v1652 = vrot.slane %v1651, 1
    %v1653 = vmax.f32 %v1651, %v1652
    %v1654 = vsel %vm1450, %v1248, -inf
    %v1655 = vrot.slane %v1654, 4
    %v1656 = vmax.f32 %v1654, %v1655
    %v1657 = vrot.slane %v1656, 2
    %v1658 = vmax.f32 %v1656, %v1657
    %v1659 = vrot.slane %v1658, 1
    %v1660 = vmax.f32 %v1658, %v1659
    %v1661 = vsel %vm1450, %v1247, -inf
    %v1662 = vrot.slane %v1661, 4
    %v1663 = vmax.f32 %v1661, %v1662
    %v1664 = vrot.slane %v1663, 2
    %v1665 = vmax.f32 %v1663, %v1664
    %v1666 = vrot.slane %v1665, 1
    %v1667 = vmax.f32 %v1665, %v1666
    %v1668 = vsel %vm1450, %v1249, -inf
    %v1669 = vrot.slane %v1668, 4
    %v1670 = vmax.f32 %v1668, %v1669
    %v1671 = vrot.slane %v1670, 2
    %v1672 = vmax.f32 %v1670, %v1671
    %v1673 = vrot.slane %v1672, 1
    %v1674 = vmax.f32 %v1672, %v1673
    %v1675 = vsel %vm1450, %v1257, -inf
    %v1676 = vrot.slane %v1675, 4
    %v1677 = vmax.f32 %v1675, %v1676
    %v1678 = vrot.slane %v1677, 2
    %v1679 = vmax.f32 %v1677, %v1678
    %v1680 = vrot.slane %v1679, 1
    %v1681 = vmax.f32 %v1679, %v1680
    %v1682 = vsel %vm1450, %v1265, -inf
    %v1683 = vrot.slane %v1682, 4
    %v1684 = vmax.f32 %v1682, %v1683
    %v1685 = vrot.slane %v1684, 2
    %v1686 = vmax.f32 %v1684, %v1685
    %v1687 = vrot.slane %v1686, 1
    %v1688 = vmax.f32 %v1686, %v1687
    %v1689 = vsel %vm1450, %v1264, -inf
    %v1690 = vrot.slane %v1689, 4
    %v1691 = vmax.f32 %v1689, %v1690
    %v1692 = vrot.slane %v1691, 2
    %v1693 = vmax.f32 %v1691, %v1692
    %v1694 = vrot.slane %v1693, 1
    %v1695 = vmax.f32 %v1693, %v1694
    %v1696 = vsel %vm1450, %v1266, -inf
    %v1697 = vrot.slane %v1696, 4
    %v1698 = vmax.f32 %v1696, %v1697
    %v1699 = vrot.slane %v1698, 2
    %v1700 = vmax.f32 %v1698, %v1699
    %v1701 = vrot.slane %v1700, 1
    %v1702 = vmax.f32 %v1700, %v1701
    %v1703 = vsel %vm1450, %v1274, -inf
    %v1704 = vrot.slane %v1703, 4
    %v1705 = vmax.f32 %v1703, %v1704
    %v1706 = vrot.slane %v1705, 2
    %v1707 = vmax.f32 %v1705, %v1706
    %v1708 = vrot.slane %v1707, 1
    %v1709 = vmax.f32 %v1707, %v1708
    %v1710 = vsel %vm1450, %v1282, -inf
    %v1711 = vrot.slane %v1710, 4
    %v1712 = vmax.f32 %v1710, %v1711
    %v1713 = vrot.slane %v1712, 2
    %v1714 = vmax.f32 %v1712, %v1713
    %v1715 = vrot.slane %v1714, 1
    %v1716 = vmax.f32 %v1714, %v1715
    %v1717 = vsel %vm1450, %v1281, -inf
    %v1718 = vrot.slane %v1717, 4
    %v1719 = vmax.f32 %v1717, %v1718
    %v1720 = vrot.slane %v1719, 2
    %v1721 = vmax.f32 %v1719, %v1720
    %v1722 = vrot.slane %v1721, 1
    %v1723 = vmax.f32 %v1721, %v1722
    %v1724 = vsel %vm1450, %v1283, -inf
    %v1725 = vrot.slane %v1724, 4
    %v1726 = vmax.f32 %v1724, %v1725
    %v1727 = vrot.slane %v1726, 2
    %v1728 = vmax.f32 %v1726, %v1727
    %v1729 = vrot.slane %v1728, 1
    %v1730 = vmax.f32 %v1728, %v1729
    %v1731 = vsel %vm1450, %v1291, -inf
    %v1732 = vrot.slane %v1731, 4
    %v1733 = vmax.f32 %v1731, %v1732
    %v1734 = vrot.slane %v1733, 2
    %v1735 = vmax.f32 %v1733, %v1734
    %v1736 = vrot.slane %v1735, 1
    %v1737 = vmax.f32 %v1735, %v1736
    %v1738 = vsel %vm1450, %v1299, -inf
    %v1739 = vrot.slane %v1738, 4
    %v1740 = vmax.f32 %v1738, %v1739
    %v1741 = vrot.slane %v1740, 2
    %v1742 = vmax.f32 %v1740, %v1741
    %v1743 = vrot.slane %v1742, 1
    %v1744 = vmax.f32 %v1742, %v1743
    %v1745 = vsel %vm1450, %v1298, -inf
    %v1746 = vrot.slane %v1745, 4
    %v1747 = vmax.f32 %v1745, %v1746
    %v1748 = vrot.slane %v1747, 2
    %v1749 = vmax.f32 %v1747, %v1748
    %v1750 = vrot.slane %v1749, 1
    %v1751 = vmax.f32 %v1749, %v1750
    %v1752 = vsel %vm1450, %v1300, -inf
    %v1753 = vrot.slane %v1752, 4
    %v1754 = vmax.f32 %v1752, %v1753
    %v1755 = vrot.slane %v1754, 2
    %v1756 = vmax.f32 %v1754, %v1755
    %v1757 = vrot.slane %v1756, 1
    %v1758 = vmax.f32 %v1756, %v1757
    %v1759 = vsel %vm1450, %v1308, -inf
    %v1760 = vrot.slane %v1759, 4
    %v1761 = vmax.f32 %v1759, %v1760
    %v1762 = vrot.slane %v1761, 2
    %v1763 = vmax.f32 %v1761, %v1762
    %v1764 = vrot.slane %v1763, 1
    %v1765 = vmax.f32 %v1763, %v1764
    %v1766 = vsel %vm1450, %v1316, -inf
    %v1767 = vrot.slane %v1766, 4
    %v1768 = vmax.f32 %v1766, %v1767
    %v1769 = vrot.slane %v1768, 2
    %v1770 = vmax.f32 %v1768, %v1769
    %v1771 = vrot.slane %v1770, 1
    %v1772 = vmax.f32 %v1770, %v1771
    %v1773 = vsel %vm1450, %v1315, -inf
    %v1774 = vrot.slane %v1773, 4
    %v1775 = vmax.f32 %v1773, %v1774
    %v1776 = vrot.slane %v1775, 2
    %v1777 = vmax.f32 %v1775, %v1776
    %v1778 = vrot.slane %v1777, 1
    %v1779 = vmax.f32 %v1777, %v1778
    %v1780 = vsel %vm1450, %v1317, -inf
    %v1781 = vrot.slane %v1780, 4
    %v1782 = vmax.f32 %v1780, %v1781
    %v1783 = vrot.slane %v1782, 2
    %v1784 = vmax.f32 %v1782, %v1783
    %v1785 = vrot.slane %v1784, 1
    %v1786 = vmax.f32 %v1784, %v1785
    %v1787 = vsel %vm1450, %v1325, -inf
    %v1788 = vrot.slane %v1787, 4
    %v1789 = vmax.f32 %v1787, %v1788
    %v1790 = vrot.slane %v1789, 2
    %v1791 = vmax.f32 %v1789, %v1790
    %v1792 = vrot.slane %v1791, 1
    %v1793 = vmax.f32 %v1791, %v1792
    %v1794 = vsel %vm1450, %v1333, -inf
    %v1795 = vrot.slane %v1794, 4
    %v1796 = vmax.f32 %v1794, %v1795
    %v1797 = vrot.slane %v1796, 2
    %v1798 = vmax.f32 %v1796, %v1797
    %v1799 = vrot.slane %v1798, 1
    %v1800 = vmax.f32 %v1798, %v1799
    %v1801 = vsel %vm1450, %v1332, -inf
    %v1802 = vrot.slane %v1801, 4
    %v1803 = vmax.f32 %v1801, %v1802
    %v1804 = vrot.slane %v1803, 2
    %v1805 = vmax.f32 %v1803, %v1804
    %v1806 = vrot.slane %v1805, 1
    %v1807 = vmax.f32 %v1805, %v1806
    %v1808 = vsel %vm1450, %v1334, -inf
    %v1809 = vrot.slane %v1808, 4
    %v1810 = vmax.f32 %v1808, %v1809
    %v1811 = vrot.slane %v1810, 2
    %v1812 = vmax.f32 %v1810, %v1811
    %v1813 = vrot.slane %v1812, 1
    %v1814 = vmax.f32 %v1812, %v1813
    %v1815 = vsel %vm1450, %v1342, -inf
    %v1816 = vrot.slane %v1815, 4
    %v1817 = vmax.f32 %v1815, %v1816
    %v1818 = vrot.slane %v1817, 2
    %v1819 = vmax.f32 %v1817, %v1818
    %v1820 = vrot.slane %v1819, 1
    %v1821 = vmax.f32 %v1819, %v1820
    %v1822 = vsel %vm1450, %v1350, -inf
    %v1823 = vrot.slane %v1822, 4
    %v1824 = vmax.f32 %v1822, %v1823
    %v1825 = vrot.slane %v1824, 2
    %v1826 = vmax.f32 %v1824, %v1825
    %v1827 = vrot.slane %v1826, 1
    %v1828 = vmax.f32 %v1826, %v1827
    %v1829 = vsel %vm1450, %v1349, -inf
    %v1830 = vrot.slane %v1829, 4
    %v1831 = vmax.f32 %v1829, %v1830
    %v1832 = vrot.slane %v1831, 2
    %v1833 = vmax.f32 %v1831, %v1832
    %v1834 = vrot.slane %v1833, 1
    %v1835 = vmax.f32 %v1833, %v1834
    %v1836 = vsel %vm1450, %v1351, -inf
    %v1837 = vrot.slane %v1836, 4
    %v1838 = vmax.f32 %v1836, %v1837
    %v1839 = vrot.slane %v1838, 2
    %v1840 = vmax.f32 %v1838, %v1839
    %v1841 = vrot.slane %v1840, 1
    %v1842 = vmax.f32 %v1840, %v1841
    %v1843 = vsel %vm1450, %v1359, -inf
    %v1844 = vrot.slane %v1843, 4
    %v1845 = vmax.f32 %v1843, %v1844
    %v1846 = vrot.slane %v1845, 2
    %v1847 = vmax.f32 %v1845, %v1846
    %v1848 = vrot.slane %v1847, 1
    %v1849 = vmax.f32 %v1847, %v1848
    %v1850 = vsel %vm1450, %v1367, -inf
    %v1851 = vrot.slane %v1850, 4
    %v1852 = vmax.f32 %v1850, %v1851
    %v1853 = vrot.slane %v1852, 2
    %v1854 = vmax.f32 %v1852, %v1853
    %v1855 = vrot.slane %v1854, 1
    %v1856 = vmax.f32 %v1854, %v1855
    %v1857 = vsel %vm1450, %v1366, -inf
    %v1858 = vrot.slane %v1857, 4
    %v1859 = vmax.f32 %v1857, %v1858
    %v1860 = vrot.slane %v1859, 2
    %v1861 = vmax.f32 %v1859, %v1860
    %v1862 = vrot.slane %v1861, 1
    %v1863 = vmax.f32 %v1861, %v1862
    %v1864 = vsel %vm1450, %v1368, -inf
    %v1865 = vrot.slane %v1864, 4
    %v1866 = vmax.f32 %v1864, %v1865
    %v1867 = vrot.slane %v1866, 2
    %v1868 = vmax.f32 %v1866, %v1867
    %v1869 = vrot.slane %v1868, 1
    %v1870 = vmax.f32 %v1868, %v1869
    %v1871 = vsel %vm1450, %v1376, -inf
    %v1872 = vrot.slane %v1871, 4
    %v1873 = vmax.f32 %v1871, %v1872
    %v1874 = vrot.slane %v1873, 2
    %v1875 = vmax.f32 %v1873, %v1874
    %v1876 = vrot.slane %v1875, 1
    %v1877 = vmax.f32 %v1875, %v1876
    %v1878 = vsel %vm1450, %v1384, -inf
    %v1879 = vrot.slane %v1878, 4
    %v1880 = vmax.f32 %v1878, %v1879
    %v1881 = vrot.slane %v1880, 2
    %v1882 = vmax.f32 %v1880, %v1881
    %v1883 = vrot.slane %v1882, 1
    %v1884 = vmax.f32 %v1882, %v1883
    %v1885 = vsel %vm1450, %v1383, -inf
    %v1886 = vrot.slane %v1885, 4
    %v1887 = vmax.f32 %v1885, %v1886
    %v1888 = vrot.slane %v1887, 2
    %v1889 = vmax.f32 %v1887, %v1888
    %v1890 = vrot.slane %v1889, 1
    %v1891 = vmax.f32 %v1889, %v1890
    %v1892 = vsel %vm1450, %v1385, -inf
    %v1893 = vrot.slane %v1892, 4
    %v1894 = vmax.f32 %v1892, %v1893
    %v1895 = vrot.slane %v1894, 2
    %v1896 = vmax.f32 %v1894, %v1895
    %v1897 = vrot.slane %v1896, 1
    %v1898 = vmax.f32 %v1896, %v1897
    %v1899 = vld [vmem:[%s8] sm:$0xf]
    %v1900 = vld [vmem:[%s8 + $0x4] sm:$0xf]
    %v1901 = vld [vmem:[%s8 + $0x8] sm:$0xf]
    %v1902 = vld [vmem:[%s8 + $0xc] sm:$0xf]
    %v1903 = vld [vmem:[%s8 + $0x10] sm:$0xf]
    %v1904 = vld [vmem:[%s8 + $0x14] sm:$0xf]
    %vm1969 = vcmask 1041409
    %v1970 = vsel %vm1969, %v1464, %v1457
    %vm1971 = vcmask 1042434
    %v1972 = vsel %vm1971, %v1471, %v1970
    %vm1973 = vcmask 1043459
    %v1974 = vsel %vm1973, %v1478, %v1972
    %vm1975 = vcmask 1044484
    %v1976 = vsel %vm1975, %v1485, %v1974
    %vm1977 = vcmask 1045509
    %v1978 = vsel %vm1977, %v1492, %v1976
    %vm1979 = vcmask 1046534
    %v1980 = vsel %vm1979, %v1499, %v1978
    %vm1981 = vcmask 1047559
    %v1982 = vsel %vm1981, %v1506, %v1980
    %v1983 = vsel %vm1969, %v1520, %v1513
    %v1984 = vsel %vm1971, %v1527, %v1983
    %v1985 = vsel %vm1973, %v1534, %v1984
    %v1986 = vsel %vm1975, %v1541, %v1985
    %v1987 = vsel %vm1977, %v1548, %v1986
    %v1988 = vsel %vm1979, %v1555, %v1987
    %v1989 = vsel %vm1981, %v1562, %v1988
    %v1990 = vsel %vm1969, %v1576, %v1569
    %v1991 = vsel %vm1971, %v1583, %v1990
    %v1992 = vsel %vm1973, %v1590, %v1991
    %v1993 = vsel %vm1975, %v1597, %v1992
    %v1994 = vsel %vm1977, %v1604, %v1993
    %v1995 = vsel %vm1979, %v1611, %v1994
    %v1996 = vsel %vm1981, %v1618, %v1995
    %v1997 = vsel %vm1969, %v1632, %v1625
    %v1998 = vsel %vm1971, %v1639, %v1997
    %v1999 = vsel %vm1973, %v1646, %v1998
    %v2000 = vsel %vm1975, %v1653, %v1999
    %v2001 = vsel %vm1977, %v1660, %v2000
    %v2002 = vsel %vm1979, %v1667, %v2001
    %v2003 = vsel %vm1981, %v1674, %v2002
    %v2004 = vsel %vm1969, %v1688, %v1681
    %v2005 = vsel %vm1971, %v1695, %v2004
    %v2006 = vsel %vm1973, %v1702, %v2005
    %v2007 = vsel %vm1975, %v1709, %v2006
    %v2008 = vsel %vm1977, %v1716, %v2007
    %v2009 = vsel %vm1979, %v1723, %v2008
    %v2010 = vsel %vm1981, %v1730, %v2009
    %v2011 = vsel %vm1969, %v1744, %v1737
    %v2012 = vsel %vm1971, %v1751, %v2011
    %v2013 = vsel %vm1973, %v1758, %v2012
    %v2014 = vsel %vm1975, %v1765, %v2013
    %v2015 = vsel %vm1977, %v1772, %v2014
    %v2016 = vsel %vm1979, %v1779, %v2015
    %v2017 = vsel %vm1981, %v1786, %v2016
    %v2018 = vsel %vm1969, %v1800, %v1793
    %v2019 = vsel %vm1971, %v1807, %v2018
    %v2020 = vsel %vm1973, %v1814, %v2019
    %v2021 = vsel %vm1975, %v1821, %v2020
    %v2022 = vsel %vm1977, %v1828, %v2021
    %v2023 = vsel %vm1979, %v1835, %v2022
    %v2024 = vsel %vm1981, %v1842, %v2023
    %v2025 = vsel %vm1969, %v1856, %v1849
    %v2026 = vsel %vm1971, %v1863, %v2025
    %v2027 = vsel %vm1973, %v1870, %v2026
    %v2028 = vsel %vm1975, %v1877, %v2027
    %v2029 = vsel %vm1977, %v1884, %v2028
    %v2030 = vsel %vm1979, %v1891, %v2029
    %v2031 = vsel %vm1981, %v1898, %v2030
    %v2040 = vrot.slane %v1982, 7
    %v2041 = vrot.slane %v1996, 7
    %v2042 = vrot.slane %v2010, 7
    %v2043 = vrot.slane %v2024, 7
    %v2044 = vrot.slane %v1989, 7
    %v2045 = vrot.slane %v2003, 7
    %v2046 = vrot.slane %v2017, 7
    %v2047 = vrot.slane %v2031, 7
    %v2048 = vsel %vm697, %v2040, %v2044
    %v2049 = vsel %vm697, %v2041, %v2045
    %v2050 = vsel %vm697, %v2042, %v2046
    %v2051 = vsel %vm697, %v2043, %v2047
    %v2052 = vsel %vm697, %v2044, %v2040
    %v2053 = vsel %vm697, %v2045, %v2041
    %v2054 = vsel %vm697, %v2046, %v2042
    %v2055 = vsel %vm697, %v2047, %v2043
    %v2056 = vsel %vm677, 0.0, %v2052
    %v2057 = vsel %vm678, 0.0, %v2048
    %v2058 = vsel %vm677, 0.0, %v2053
    %v2059 = vsel %vm678, 0.0, %v2049
    %v2060 = vsel %vm677, 0.0, %v2054
    %v2061 = vsel %vm678, 0.0, %v2050
    %v2062 = vsel %vm677, 0.0, %v2055
    %v2063 = vsel %vm678, 0.0, %v2051
    %vm2064 = vcmp.eq.s32.totalorder %v673, 15
    %vm2065 = vcmp.eq.s32.totalorder %v674, 15
    %v2066 = vrot.slane %v1982, 1
    %v2067 = vrot.slane %v1996, 1
    %v2068 = vrot.slane %v2010, 1
    %v2069 = vrot.slane %v2024, 1
    %v2070 = vrot.slane %v1989, 1
    %v2071 = vrot.slane %v2003, 1
    %v2072 = vrot.slane %v2017, 1
    %v2073 = vrot.slane %v2031, 1
    %v2074 = vsel %vm750, %v2066, %v2070
    %v2075 = vsel %vm750, %v2067, %v2071
    %v2076 = vsel %vm750, %v2068, %v2072
    %v2077 = vsel %vm750, %v2069, %v2073
    %v2078 = vsel %vm750, %v2070, %v2066
    %v2079 = vsel %vm750, %v2071, %v2067
    %v2080 = vsel %vm750, %v2072, %v2068
    %v2081 = vsel %vm750, %v2073, %v2069
    %v2082 = vsel %vm2064, 0.0, %v2074
    %v2083 = vsel %vm2065, 0.0, %v2078
    %v2084 = vsel %vm2064, 0.0, %v2075
    %v2085 = vsel %vm2065, 0.0, %v2079
    %v2086 = vsel %vm2064, 0.0, %v2076
    %v2087 = vsel %vm2065, 0.0, %v2080
    %v2088 = vsel %vm2064, 0.0, %v2077
    %v2089 = vsel %vm2065, 0.0, %v2081
    %2090 = vrot.lane.b32.xlu0 %v1982, 16
    %v2091 = vpop.permute.xlu0 %2090
    %2092 = vrot.lane.b32.xlu0 %v1989, 16
    %v2093 = vpop.permute.xlu0 %2092
    %2094 = vrot.lane.b32.xlu0 %v1996, 16
    %v2095 = vpop.permute.xlu0 %2094
    %2096 = vrot.lane.b32.xlu0 %v2003, 16
    %v2097 = vpop.permute.xlu0 %2096
    %2098 = vrot.lane.b32.xlu0 %v2010, 16
    %v2099 = vpop.permute.xlu0 %2098
    %2100 = vrot.lane.b32.xlu0 %v2017, 16
    %v2101 = vpop.permute.xlu0 %2100
    %2102 = vrot.lane.b32.xlu0 %v2024, 16
    %v2103 = vpop.permute.xlu0 %2102
    %2104 = vrot.lane.b32.xlu0 %v2031, 16
    %v2105 = vpop.permute.xlu0 %2104
    %2122 = vrot.lane.b32.xlu0 %v2082, 32
    %v2123 = vpop.permute.xlu0 %2122
    %2124 = vrot.lane.b32.xlu0 %v2083, 32
    %v2125 = vpop.permute.xlu0 %2124
    %2126 = vrot.lane.b32.xlu0 %v2084, 32
    %v2127 = vpop.permute.xlu0 %2126
    %2128 = vrot.lane.b32.xlu0 %v2085, 32
    %v2129 = vpop.permute.xlu0 %2128
    %2130 = vrot.lane.b32.xlu0 %v2086, 32
    %v2131 = vpop.permute.xlu0 %2130
    %2132 = vrot.lane.b32.xlu0 %v2087, 32
    %v2133 = vpop.permute.xlu0 %2132
    %2134 = vrot.lane.b32.xlu0 %v2088, 32
    %v2135 = vpop.permute.xlu0 %2134
    %2136 = vrot.lane.b32.xlu0 %v2089, 32
    %v2137 = vpop.permute.xlu0 %2136
    %vm2146 = vcmask 130048
    %v2147 = vsel %vm2146, %v2056, %v2091
    %v2148 = vsel %vm2146, %v2057, %v2093
    %v2149 = vsel %vm2146, %v2058, %v2095
    %v2150 = vsel %vm2146, %v2059, %v2097
    %v2151 = vsel %vm2146, %v2060, %v2099
    %v2152 = vsel %vm2146, %v2061, %v2101
    %v2153 = vsel %vm2146, %v2062, %v2103
    %v2154 = vsel %vm2146, %v2063, %v2105
    %v2155 = vsel %vm130, %v2147, %v2123
    %v2156 = vsel %vm130, %v2148, %v2125
    %v2157 = vsel %vm130, %v2149, %v2127
    %v2158 = vsel %vm130, %v2150, %v2129
    %v2159 = vsel %vm130, %v2151, %v2131
    %v2160 = vsel %vm130, %v2152, %v2133
    %v2161 = vsel %vm130, %v2153, %v2135
    %v2162 = vsel %vm130, %v2154, %v2137
    %v2163 = vpack.c.bf16 %v2156, %v2155
    %v2164 = vpack.c.bf16 %v2158, %v2157
    %v2165 = vpack.c.bf16 %v2160, %v2159
    %v2166 = vpack.c.bf16 %v2162, %v2161
    %v2173 = vunpack.c.l.b16 %v1899
    %v2174 = vunpack.c.l.b16 %v1900
    %v2175 = vunpack.c.l.b16 %v1901
    %v2176 = vunpack.c.l.b16 %v1902
    %v2177 = vunpack.c.l.b16 %v1903
    %v2178 = vunpack.c.l.b16 %v1904
    %v2179 = vpack.c.b16 %v2174, %v2173
    %v2180 = vpack.c.b16 %v2176, %v2175
    %v2181 = vpack.c.b16 %v2178, %v2177
    %vm2185 = vcmask 392192
    %v2187 = vsel %vm2185, %v2163, 0
    %v2190 = vsel %vm2185, %v2164, 0
    %v2193 = vsel %vm2185, %v2165, 0
    %v2196 = vsel %vm2185, %v2166, 0
    %2198 = vmatprep.subr.bf16.mxu0 0
    %2199 = vmatpush1.bf16.msra.mxu0 %v2179
    %2200 = vmatprep.subr.bf16.mxu0 0
    %2201 = vmatpush1.bf16.msra.mxu0 %v2180
    %2202 = vmatprep.subr.bf16.mxu0 0
    %2203 = vmatpush1.bf16.msra.mxu0 %v2181
    %2204 = vmatprep.subr.bf16.mxu0 0
    %2205 = vmatpush1.bf16.msra.mxu0 0
    %2206 = vmatprep.subr.bf16.mxu0 0
    %2207 = vmatpush1.bf16.msra.mxu0 0
    %2208 = vmatprep.subr.bf16.mxu0 0
    %2209 = vmatpush1.bf16.msra.mxu0 0
    %2210 = vmatprep.subr.bf16.mxu0 0
    %2211 = vmatpush1.bf16.msra.mxu0 0
    %2212 = vmatprep.subr.bf16.mxu0 0
    %2213 = vmatpush1.bf16.msra.mxu0 0
    %2214 = vmatprep.subr.bf16.mxu0 0
    %2215 = vmatpush1.bf16.msra.mxu0 0
    %2216 = vmatprep.subr.bf16.mxu0 0
    %2217 = vmatpush1.bf16.msra.mxu0 0
    %2218 = vmatprep.subr.bf16.mxu0 0
    %2219 = vmatpush1.bf16.msra.mxu0 0
    %2220 = vmatprep.subr.bf16.mxu0 0
    %2221 = vmatpush1.bf16.msra.mxu0 0
    %2222 = vmatprep.subr.bf16.mxu0 0
    %2223 = vmatpush1.bf16.msra.mxu0 0
    %2224 = vmatprep.subr.bf16.mxu0 0
    %2225 = vmatpush1.bf16.msra.mxu0 0
    %2226 = vmatprep.subr.bf16.mxu0 0
    %2227 = vmatpush1.bf16.msra.mxu0 0
    %2228 = vmatprep.subr.bf16.mxu0 0
    %2229 = vmatpush1.bf16.msra.mxu0 0
    %2230 = vmatprep.mubr.bf16.mxu0 0
    %2231 = vmatmul.mubr.bf16.gmra.mrb[0].mxu0 %v2187
    %v2232 = vpop.f32.mrb[0].mxu0
    %v2233 = vadd.f32 0.0, %v2232
    %v2234 = vpop.f32.mrb[0].mxu0
    %v2235 = vpop.f32.mrb[0].mxu0
    %v2236 = vadd.f32 0.0, %v2235
    %v2237 = vpop.f32.mrb[0].mxu0
    %2238 = vmatprep.mubr.bf16.mxu0 0
    %2239 = vmatmul.mubr.bf16.gmra.mrb[0].mxu0 %v2190
    %v2240 = vpop.f32.mrb[0].mxu0
    %v2241 = vadd.f32 0.0, %v2240
    %v2242 = vpop.f32.mrb[0].mxu0
    %v2243 = vpop.f32.mrb[0].mxu0
    %v2244 = vadd.f32 0.0, %v2243
    %v2245 = vpop.f32.mrb[0].mxu0
    %2246 = vmatprep.mubr.bf16.mxu0 0
    %2247 = vmatmul.mubr.bf16.gmra.mrb[0].mxu0 %v2193
    %v2248 = vpop.f32.mrb[0].mxu0
    %v2249 = vadd.f32 0.0, %v2248
    %v2250 = vpop.f32.mrb[0].mxu0
    %v2251 = vpop.f32.mrb[0].mxu0
    %v2252 = vadd.f32 0.0, %v2251
    %v2253 = vpop.f32.mrb[0].mxu0
    %2254 = vmatprep.mubr.bf16.mxu0 0
    %2255 = vmatmul.mubr.bf16.gmra.mrb[0].mxu0 %v2196
    %v2256 = vpop.f32.mrb[0].mxu0
    %v2257 = vadd.f32 0.0, %v2256
    %v2258 = vpop.f32.mrb[0].mxu0
    %v2259 = vpop.f32.mrb[0].mxu0
    %v2260 = vadd.f32 0.0, %v2259
    %v2261 = vpop.f32.mrb[0].mxu0
    %2262 = vdwg.mxu0
    %v2263 = vld [vmem:[%s9] sm:$0x1]
    %v2264 = vld [vmem:[%s10] sm:$0x1]
    %v2266 = vlaneseq
    %v2267 = vshrl.u32 %v2266, 7
    %v2268 = vsub.s32 0, %v2267
    %v2269 = vrot.slane %v2263, %v2268
    %v2271 = vmul.f32 %v2233, %v2269
    %v2272 = vmul.f32 %v2236, %v2269
    %v2273 = vmul.f32 %v2241, %v2269
    %v2274 = vmul.f32 %v2244, %v2269
    %v2275 = vmul.f32 %v2249, %v2269
    %v2276 = vmul.f32 %v2252, %v2269
    %v2277 = vmul.f32 %v2257, %v2269
    %v2278 = vmul.f32 %v2260, %v2269
    %v2280 = vlaneseq
    %v2281 = vshrl.u32 %v2280, 7
    %v2282 = vsub.s32 0, %v2281
    %v2283 = vrot.slane %v2264, %v2282
    %v2285 = vadd.f32 %v2271, %v2283
    %v2286 = vadd.f32 %v2272, %v2283
    %v2287 = vadd.f32 %v2273, %v2283
    %v2288 = vadd.f32 %v2274, %v2283
    %v2289 = vadd.f32 %v2275, %v2283
    %v2290 = vadd.f32 %v2276, %v2283
    %v2291 = vadd.f32 %v2277, %v2283
    %v2292 = vadd.f32 %v2278, %v2283
    %v2293 = vmax.f32 %v2285, 0.0
    %v2294 = vmax.f32 %v2286, 0.0
    %v2295 = vmax.f32 %v2287, 0.0
    %v2296 = vmax.f32 %v2288, 0.0
    %v2297 = vmax.f32 %v2289, 0.0
    %v2298 = vmax.f32 %v2290, 0.0
    %v2299 = vmax.f32 %v2291, 0.0
    %v2300 = vmax.f32 %v2292, 0.0
    %v2309 = vcombine.high %v2293, %v2293
    %v2311 = vunpack.c.l.s4 1983009808
    %v2312 = vunpack.c.0.s8 %v2311
    %v2313 = vlaneseq
    %v2314 = vshrl.u32 %v2313, 7
    %v2315 = vsub.s32 %v2312, %v2314
    %v2316 = vrot.slane %v2293, %v2315
    %v2318 = vunpack.c.l.s4 1983009808
    %v2319 = vunpack.c.0.s8 %v2318
    %v2320 = vlaneseq
    %v2321 = vshrl.u32 %v2320, 7
    %v2322 = vsub.s32 %v2319, %v2321
    %v2323 = vrot.slane %v2309, %v2322
    %v2324 = vcombine.high %v2316, %v2316
    %v2325 = vcombine.high %v2323, %v2323
    %v2326 = vcombine.high %v2294, %v2294
    %v2328 = vunpack.c.l.s4 1983009808
    %v2329 = vunpack.c.0.s8 %v2328
    %v2330 = vlaneseq
    %v2331 = vshrl.u32 %v2330, 7
    %v2332 = vsub.s32 %v2329, %v2331
    %v2333 = vrot.slane %v2294, %v2332
    %v2335 = vunpack.c.l.s4 1983009808
    %v2336 = vunpack.c.0.s8 %v2335
    %v2337 = vlaneseq
    %v2338 = vshrl.u32 %v2337, 7
    %v2339 = vsub.s32 %v2336, %v2338
    %v2340 = vrot.slane %v2326, %v2339
    %v2341 = vcombine.high %v2333, %v2333
    %v2342 = vcombine.high %v2340, %v2340
    %v2343 = vcombine.high %v2295, %v2295
    %v2345 = vunpack.c.l.s4 1983009808
    %v2346 = vunpack.c.0.s8 %v2345
    %v2347 = vlaneseq
    %v2348 = vshrl.u32 %v2347, 7
    %v2349 = vsub.s32 %v2346, %v2348
    %v2350 = vrot.slane %v2295, %v2349
    %v2352 = vunpack.c.l.s4 1983009808
    %v2353 = vunpack.c.0.s8 %v2352
    %v2354 = vlaneseq
    %v2355 = vshrl.u32 %v2354, 7
    %v2356 = vsub.s32 %v2353, %v2355
    %v2357 = vrot.slane %v2343, %v2356
    %v2358 = vcombine.high %v2350, %v2350
    %v2359 = vcombine.high %v2357, %v2357
    %v2360 = vcombine.high %v2296, %v2296
    %v2362 = vunpack.c.l.s4 1983009808
    %v2363 = vunpack.c.0.s8 %v2362
    %v2364 = vlaneseq
    %v2365 = vshrl.u32 %v2364, 7
    %v2366 = vsub.s32 %v2363, %v2365
    %v2367 = vrot.slane %v2296, %v2366
    %v2369 = vunpack.c.l.s4 1983009808
    %v2370 = vunpack.c.0.s8 %v2369
    %v2371 = vlaneseq
    %v2372 = vshrl.u32 %v2371, 7
    %v2373 = vsub.s32 %v2370, %v2372
    %v2374 = vrot.slane %v2360, %v2373
    %v2375 = vcombine.high %v2367, %v2367
    %v2376 = vcombine.high %v2374, %v2374
    %v2377 = vcombine.high %v2297, %v2297
    %v2379 = vunpack.c.l.s4 1983009808
    %v2380 = vunpack.c.0.s8 %v2379
    %v2381 = vlaneseq
    %v2382 = vshrl.u32 %v2381, 7
    %v2383 = vsub.s32 %v2380, %v2382
    %v2384 = vrot.slane %v2297, %v2383
    %v2386 = vunpack.c.l.s4 1983009808
    %v2387 = vunpack.c.0.s8 %v2386
    %v2388 = vlaneseq
    %v2389 = vshrl.u32 %v2388, 7
    %v2390 = vsub.s32 %v2387, %v2389
    %v2391 = vrot.slane %v2377, %v2390
    %v2392 = vcombine.high %v2384, %v2384
    %v2393 = vcombine.high %v2391, %v2391
    %v2394 = vcombine.high %v2298, %v2298
    %v2396 = vunpack.c.l.s4 1983009808
    %v2397 = vunpack.c.0.s8 %v2396
    %v2398 = vlaneseq
    %v2399 = vshrl.u32 %v2398, 7
    %v2400 = vsub.s32 %v2397, %v2399
    %v2401 = vrot.slane %v2298, %v2400
    %v2403 = vunpack.c.l.s4 1983009808
    %v2404 = vunpack.c.0.s8 %v2403
    %v2405 = vlaneseq
    %v2406 = vshrl.u32 %v2405, 7
    %v2407 = vsub.s32 %v2404, %v2406
    %v2408 = vrot.slane %v2394, %v2407
    %v2409 = vcombine.high %v2401, %v2401
    %v2410 = vcombine.high %v2408, %v2408
    %v2411 = vcombine.high %v2299, %v2299
    %v2413 = vunpack.c.l.s4 1983009808
    %v2414 = vunpack.c.0.s8 %v2413
    %v2415 = vlaneseq
    %v2416 = vshrl.u32 %v2415, 7
    %v2417 = vsub.s32 %v2414, %v2416
    %v2418 = vrot.slane %v2299, %v2417
    %v2420 = vunpack.c.l.s4 1983009808
    %v2421 = vunpack.c.0.s8 %v2420
    %v2422 = vlaneseq
    %v2423 = vshrl.u32 %v2422, 7
    %v2424 = vsub.s32 %v2421, %v2423
    %v2425 = vrot.slane %v2411, %v2424
    %v2426 = vcombine.high %v2418, %v2418
    %v2427 = vcombine.high %v2425, %v2425
    %v2428 = vcombine.high %v2300, %v2300
    %v2430 = vunpack.c.l.s4 1983009808
    %v2431 = vunpack.c.0.s8 %v2430
    %v2432 = vlaneseq
    %v2433 = vshrl.u32 %v2432, 7
    %v2434 = vsub.s32 %v2431, %v2433
    %v2435 = vrot.slane %v2300, %v2434
    %v2437 = vunpack.c.l.s4 1983009808
    %v2438 = vunpack.c.0.s8 %v2437
    %v2439 = vlaneseq
    %v2440 = vshrl.u32 %v2439, 7
    %v2441 = vsub.s32 %v2438, %v2440
    %v2442 = vrot.slane %v2428, %v2441
    %v2443 = vcombine.high %v2435, %v2435
    %v2444 = vcombine.high %v2442, %v2442
    %vm2477 = vcmask 58368
    %v2478 = vsel %vm2477, %v2316, -inf
    %v2479 = vrot.slane %v2478, 4
    %v2480 = vmax.f32 %v2478, %v2479
    %v2481 = vrot.slane %v2480, 2
    %v2482 = vmax.f32 %v2480, %v2481
    %v2483 = vrot.slane %v2482, 1
    %v2484 = vmax.f32 %v2482, %v2483
    %v2485 = vsel %vm2477, %v2324, -inf
    %v2486 = vrot.slane %v2485, 4
    %v2487 = vmax.f32 %v2485, %v2486
    %v2488 = vrot.slane %v2487, 2
    %v2489 = vmax.f32 %v2487, %v2488
    %v2490 = vrot.slane %v2489, 1
    %v2491 = vmax.f32 %v2489, %v2490
    %v2492 = vsel %vm2477, %v2323, -inf
    %v2493 = vrot.slane %v2492, 4
    %v2494 = vmax.f32 %v2492, %v2493
    %v2495 = vrot.slane %v2494, 2
    %v2496 = vmax.f32 %v2494, %v2495
    %v2497 = vrot.slane %v2496, 1
    %v2498 = vmax.f32 %v2496, %v2497
    %v2499 = vsel %vm2477, %v2325, -inf
    %v2500 = vrot.slane %v2499, 4
    %v2501 = vmax.f32 %v2499, %v2500
    %v2502 = vrot.slane %v2501, 2
    %v2503 = vmax.f32 %v2501, %v2502
    %v2504 = vrot.slane %v2503, 1
    %v2505 = vmax.f32 %v2503, %v2504
    %v2506 = vsel %vm2477, %v2333, -inf
    %v2507 = vrot.slane %v2506, 4
    %v2508 = vmax.f32 %v2506, %v2507
    %v2509 = vrot.slane %v2508, 2
    %v2510 = vmax.f32 %v2508, %v2509
    %v2511 = vrot.slane %v2510, 1
    %v2512 = vmax.f32 %v2510, %v2511
    %v2513 = vsel %vm2477, %v2341, -inf
    %v2514 = vrot.slane %v2513, 4
    %v2515 = vmax.f32 %v2513, %v2514
    %v2516 = vrot.slane %v2515, 2
    %v2517 = vmax.f32 %v2515, %v2516
    %v2518 = vrot.slane %v2517, 1
    %v2519 = vmax.f32 %v2517, %v2518
    %v2520 = vsel %vm2477, %v2340, -inf
    %v2521 = vrot.slane %v2520, 4
    %v2522 = vmax.f32 %v2520, %v2521
    %v2523 = vrot.slane %v2522, 2
    %v2524 = vmax.f32 %v2522, %v2523
    %v2525 = vrot.slane %v2524, 1
    %v2526 = vmax.f32 %v2524, %v2525
    %v2527 = vsel %vm2477, %v2342, -inf
    %v2528 = vrot.slane %v2527, 4
    %v2529 = vmax.f32 %v2527, %v2528
    %v2530 = vrot.slane %v2529, 2
    %v2531 = vmax.f32 %v2529, %v2530
    %v2532 = vrot.slane %v2531, 1
    %v2533 = vmax.f32 %v2531, %v2532
    %v2534 = vsel %vm2477, %v2350, -inf
    %v2535 = vrot.slane %v2534, 4
    %v2536 = vmax.f32 %v2534, %v2535
    %v2537 = vrot.slane %v2536, 2
    %v2538 = vmax.f32 %v2536, %v2537
    %v2539 = vrot.slane %v2538, 1
    %v2540 = vmax.f32 %v2538, %v2539
    %v2541 = vsel %vm2477, %v2358, -inf
    %v2542 = vrot.slane %v2541, 4
    %v2543 = vmax.f32 %v2541, %v2542
    %v2544 = vrot.slane %v2543, 2
    %v2545 = vmax.f32 %v2543, %v2544
    %v2546 = vrot.slane %v2545, 1
    %v2547 = vmax.f32 %v2545, %v2546
    %v2548 = vsel %vm2477, %v2357, -inf
    %v2549 = vrot.slane %v2548, 4
    %v2550 = vmax.f32 %v2548, %v2549
    %v2551 = vrot.slane %v2550, 2
    %v2552 = vmax.f32 %v2550, %v2551
    %v2553 = vrot.slane %v2552, 1
    %v2554 = vmax.f32 %v2552, %v2553
    %v2555 = vsel %vm2477, %v2359, -inf
    %v2556 = vrot.slane %v2555, 4
    %v2557 = vmax.f32 %v2555, %v2556
    %v2558 = vrot.slane %v2557, 2
    %v2559 = vmax.f32 %v2557, %v2558
    %v2560 = vrot.slane %v2559, 1
    %v2561 = vmax.f32 %v2559, %v2560
    %v2562 = vsel %vm2477, %v2367, -inf
    %v2563 = vrot.slane %v2562, 4
    %v2564 = vmax.f32 %v2562, %v2563
    %v2565 = vrot.slane %v2564, 2
    %v2566 = vmax.f32 %v2564, %v2565
    %v2567 = vrot.slane %v2566, 1
    %v2568 = vmax.f32 %v2566, %v2567
    %v2569 = vsel %vm2477, %v2375, -inf
    %v2570 = vrot.slane %v2569, 4
    %v2571 = vmax.f32 %v2569, %v2570
    %v2572 = vrot.slane %v2571, 2
    %v2573 = vmax.f32 %v2571, %v2572
    %v2574 = vrot.slane %v2573, 1
    %v2575 = vmax.f32 %v2573, %v2574
    %v2576 = vsel %vm2477, %v2374, -inf
    %v2577 = vrot.slane %v2576, 4
    %v2578 = vmax.f32 %v2576, %v2577
    %v2579 = vrot.slane %v2578, 2
    %v2580 = vmax.f32 %v2578, %v2579
    %v2581 = vrot.slane %v2580, 1
    %v2582 = vmax.f32 %v2580, %v2581
    %v2583 = vsel %vm2477, %v2376, -inf
    %v2584 = vrot.slane %v2583, 4
    %v2585 = vmax.f32 %v2583, %v2584
    %v2586 = vrot.slane %v2585, 2
    %v2587 = vmax.f32 %v2585, %v2586
    %v2588 = vrot.slane %v2587, 1
    %v2589 = vmax.f32 %v2587, %v2588
    %v2590 = vsel %vm2477, %v2384, -inf
    %v2591 = vrot.slane %v2590, 4
    %v2592 = vmax.f32 %v2590, %v2591
    %v2593 = vrot.slane %v2592, 2
    %v2594 = vmax.f32 %v2592, %v2593
    %v2595 = vrot.slane %v2594, 1
    %v2596 = vmax.f32 %v2594, %v2595
    %v2597 = vsel %vm2477, %v2392, -inf
    %v2598 = vrot.slane %v2597, 4
    %v2599 = vmax.f32 %v2597, %v2598
    %v2600 = vrot.slane %v2599, 2
    %v2601 = vmax.f32 %v2599, %v2600
    %v2602 = vrot.slane %v2601, 1
    %v2603 = vmax.f32 %v2601, %v2602
    %v2604 = vsel %vm2477, %v2391, -inf
    %v2605 = vrot.slane %v2604, 4
    %v2606 = vmax.f32 %v2604, %v2605
    %v2607 = vrot.slane %v2606, 2
    %v2608 = vmax.f32 %v2606, %v2607
    %v2609 = vrot.slane %v2608, 1
    %v2610 = vmax.f32 %v2608, %v2609
    %v2611 = vsel %vm2477, %v2393, -inf
    %v2612 = vrot.slane %v2611, 4
    %v2613 = vmax.f32 %v2611, %v2612
    %v2614 = vrot.slane %v2613, 2
    %v2615 = vmax.f32 %v2613, %v2614
    %v2616 = vrot.slane %v2615, 1
    %v2617 = vmax.f32 %v2615, %v2616
    %v2618 = vsel %vm2477, %v2401, -inf
    %v2619 = vrot.slane %v2618, 4
    %v2620 = vmax.f32 %v2618, %v2619
    %v2621 = vrot.slane %v2620, 2
    %v2622 = vmax.f32 %v2620, %v2621
    %v2623 = vrot.slane %v2622, 1
    %v2624 = vmax.f32 %v2622, %v2623
    %v2625 = vsel %vm2477, %v2409, -inf
    %v2626 = vrot.slane %v2625, 4
    %v2627 = vmax.f32 %v2625, %v2626
    %v2628 = vrot.slane %v2627, 2
    %v2629 = vmax.f32 %v2627, %v2628
    %v2630 = vrot.slane %v2629, 1
    %v2631 = vmax.f32 %v2629, %v2630
    %v2632 = vsel %vm2477, %v2408, -inf
    %v2633 = vrot.slane %v2632, 4
    %v2634 = vmax.f32 %v2632, %v2633
    %v2635 = vrot.slane %v2634, 2
    %v2636 = vmax.f32 %v2634, %v2635
    %v2637 = vrot.slane %v2636, 1
    %v2638 = vmax.f32 %v2636, %v2637
    %v2639 = vsel %vm2477, %v2410, -inf
    %v2640 = vrot.slane %v2639, 4
    %v2641 = vmax.f32 %v2639, %v2640
    %v2642 = vrot.slane %v2641, 2
    %v2643 = vmax.f32 %v2641, %v2642
    %v2644 = vrot.slane %v2643, 1
    %v2645 = vmax.f32 %v2643, %v2644
    %v2646 = vsel %vm2477, %v2418, -inf
    %v2647 = vrot.slane %v2646, 4
    %v2648 = vmax.f32 %v2646, %v2647
    %v2649 = vrot.slane %v2648, 2
    %v2650 = vmax.f32 %v2648, %v2649
    %v2651 = vrot.slane %v2650, 1
    %v2652 = vmax.f32 %v2650, %v2651
    %v2653 = vsel %vm2477, %v2426, -inf
    %v2654 = vrot.slane %v2653, 4
    %v2655 = vmax.f32 %v2653, %v2654
    %v2656 = vrot.slane %v2655, 2
    %v2657 = vmax.f32 %v2655, %v2656
    %v2658 = vrot.slane %v2657, 1
    %v2659 = vmax.f32 %v2657, %v2658
    %v2660 = vsel %vm2477, %v2425, -inf
    %v2661 = vrot.slane %v2660, 4
    %v2662 = vmax.f32 %v2660, %v2661
    %v2663 = vrot.slane %v2662, 2
    %v2664 = vmax.f32 %v2662, %v2663
    %v2665 = vrot.slane %v2664, 1
    %v2666 = vmax.f32 %v2664, %v2665
    %v2667 = vsel %vm2477, %v2427, -inf
    %v2668 = vrot.slane %v2667, 4
    %v2669 = vmax.f32 %v2667, %v2668
    %v2670 = vrot.slane %v2669, 2
    %v2671 = vmax.f32 %v2669, %v2670
    %v2672 = vrot.slane %v2671, 1
    %v2673 = vmax.f32 %v2671, %v2672
    %v2674 = vsel %vm2477, %v2435, -inf
    %v2675 = vrot.slane %v2674, 4
    %v2676 = vmax.f32 %v2674, %v2675
    %v2677 = vrot.slane %v2676, 2
    %v2678 = vmax.f32 %v2676, %v2677
    %v2679 = vrot.slane %v2678, 1
    %v2680 = vmax.f32 %v2678, %v2679
    %v2681 = vsel %vm2477, %v2443, -inf
    %v2682 = vrot.slane %v2681, 4
    %v2683 = vmax.f32 %v2681, %v2682
    %v2684 = vrot.slane %v2683, 2
    %v2685 = vmax.f32 %v2683, %v2684
    %v2686 = vrot.slane %v2685, 1
    %v2687 = vmax.f32 %v2685, %v2686
    %v2688 = vsel %vm2477, %v2442, -inf
    %v2689 = vrot.slane %v2688, 4
    %v2690 = vmax.f32 %v2688, %v2689
    %v2691 = vrot.slane %v2690, 2
    %v2692 = vmax.f32 %v2690, %v2691
    %v2693 = vrot.slane %v2692, 1
    %v2694 = vmax.f32 %v2692, %v2693
    %v2695 = vsel %vm2477, %v2444, -inf
    %v2696 = vrot.slane %v2695, 4
    %v2697 = vmax.f32 %v2695, %v2696
    %v2698 = vrot.slane %v2697, 2
    %v2699 = vmax.f32 %v2697, %v2698
    %v2700 = vrot.slane %v2699, 1
    %v2701 = vmax.f32 %v2699, %v2700
    %v2702 = vld [vmem:[%s11] sm:$0xf]
    %v2703 = vld [vmem:[%s11 + $0x4] sm:$0xf]
    %v2704 = vld [vmem:[%s11 + $0x8] sm:$0xf]
    %v2737 = vsel %vm1969, %v2491, %v2484
    %v2738 = vsel %vm1971, %v2498, %v2737
    %v2739 = vsel %vm1973, %v2505, %v2738
    %v2740 = vsel %vm1975, %v2512, %v2739
    %v2741 = vsel %vm1977, %v2519, %v2740
    %v2742 = vsel %vm1979, %v2526, %v2741
    %v2743 = vsel %vm1981, %v2533, %v2742
    %v2744 = vsel %vm1969, %v2547, %v2540
    %v2745 = vsel %vm1971, %v2554, %v2744
    %v2746 = vsel %vm1973, %v2561, %v2745
    %v2747 = vsel %vm1975, %v2568, %v2746
    %v2748 = vsel %vm1977, %v2575, %v2747
    %v2749 = vsel %vm1979, %v2582, %v2748
    %v2750 = vsel %vm1981, %v2589, %v2749
    %v2751 = vsel %vm1969, %v2603, %v2596
    %v2752 = vsel %vm1971, %v2610, %v2751
    %v2753 = vsel %vm1973, %v2617, %v2752
    %v2754 = vsel %vm1975, %v2624, %v2753
    %v2755 = vsel %vm1977, %v2631, %v2754
    %v2756 = vsel %vm1979, %v2638, %v2755
    %v2757 = vsel %vm1981, %v2645, %v2756
    %v2758 = vsel %vm1969, %v2659, %v2652
    %v2759 = vsel %vm1971, %v2666, %v2758
    %v2760 = vsel %vm1973, %v2673, %v2759
    %v2761 = vsel %vm1975, %v2680, %v2760
    %v2762 = vsel %vm1977, %v2687, %v2761
    %v2763 = vsel %vm1979, %v2694, %v2762
    %v2764 = vsel %vm1981, %v2701, %v2763
    %v2769 = vrot.slane %v2743, 7
    %v2770 = vrot.slane %v2750, 7
    %v2771 = vrot.slane %v2757, 7
    %v2772 = vrot.slane %v2764, 7
    %v2773 = vsel %vm677, 0.0, %v2769
    %v2774 = vsel %vm677, 0.0, %v2770
    %v2775 = vsel %vm677, 0.0, %v2771
    %v2776 = vsel %vm677, 0.0, %v2772
    %vm2777 = vcmp.eq.s32.totalorder %v673, 7
    %v2778 = vrot.slane %v2743, 1
    %v2779 = vrot.slane %v2750, 1
    %v2780 = vrot.slane %v2757, 1
    %v2781 = vrot.slane %v2764, 1
    %v2782 = vsel %vm2777, 0.0, %v2778
    %v2783 = vsel %vm2777, 0.0, %v2779
    %v2784 = vsel %vm2777, 0.0, %v2780
    %v2785 = vsel %vm2777, 0.0, %v2781
    %2786 = vrot.lane.b32.xlu0 %v2743, 8
    %v2787 = vpop.permute.xlu0 %2786
    %2788 = vrot.lane.b32.xlu0 %v2750, 8
    %v2789 = vpop.permute.xlu0 %2788
    %2790 = vrot.lane.b32.xlu0 %v2757, 8
    %v2791 = vpop.permute.xlu0 %2790
    %2792 = vrot.lane.b32.xlu0 %v2764, 8
    %v2793 = vpop.permute.xlu0 %2792
    %2802 = vrot.lane.b32.xlu0 %v2782, 16
    %v2803 = vpop.permute.xlu0 %2802
    %2804 = vrot.lane.b32.xlu0 %v2783, 16
    %v2805 = vpop.permute.xlu0 %2804
    %2806 = vrot.lane.b32.xlu0 %v2784, 16
    %v2807 = vpop.permute.xlu0 %2806
    %2808 = vrot.lane.b32.xlu0 %v2785, 16
    %v2809 = vpop.permute.xlu0 %2808
    %vm2814 = vcmask 64512
    %v2815 = vsel %vm2814, %v2773, %v2787
    %v2816 = vsel %vm2814, %v2774, %v2789
    %v2817 = vsel %vm2814, %v2775, %v2791
    %v2818 = vsel %vm2814, %v2776, %v2793
    %v2819 = vsel %vm2146, %v2815, %v2803
    %v2820 = vsel %vm2146, %v2816, %v2805
    %v2821 = vsel %vm2146, %v2817, %v2807
    %v2822 = vsel %vm2146, %v2818, %v2809
    %v2823 = vpack.c.bf16 %v2820, %v2819
    %v2824 = vpack.c.bf16 %v2822, %v2821
    %v2828 = vunpack.c.l.b16 %v2702
    %v2829 = vunpack.c.l.b16 %v2703
    %v2830 = vunpack.c.l.b16 %v2704
    %v2831 = vpack.c.b16 %v2829, %v2828
    %v2832 = vpack.c.b16 %v2830, %v2830
    %vm2834 = vcmask 195584
    %v2836 = vsel %vm2834, %v2823, 0
    %v2839 = vsel %vm2834, %v2824, 0
    %v2842 = vsel %vm577, %v2832, 0
    %2844 = vmatprep.subr.bf16.mxu0 0
    %2845 = vmatpush1.bf16.msra.mxu0 %v2831
    %2846 = vmatprep.subr.bf16.mxu0 0
    %2847 = vmatpush1.bf16.msra.mxu0 %v2842
    %2848 = vmatprep.subr.bf16.mxu0 0
    %2849 = vmatpush1.bf16.msra.mxu0 0
    %2850 = vmatprep.subr.bf16.mxu0 0
    %2851 = vmatpush1.bf16.msra.mxu0 0
    %2852 = vmatprep.subr.bf16.mxu0 0
    %2853 = vmatpush1.bf16.msra.mxu0 0
    %2854 = vmatprep.subr.bf16.mxu0 0
    %2855 = vmatpush1.bf16.msra.mxu0 0
    %2856 = vmatprep.subr.bf16.mxu0 0
    %2857 = vmatpush1.bf16.msra.mxu0 0
    %2858 = vmatprep.subr.bf16.mxu0 0
    %2859 = vmatpush1.bf16.msra.mxu0 0
    %2860 = vmatprep.subr.bf16.mxu0 0
    %2861 = vmatpush1.bf16.msra.mxu0 0
    %2862 = vmatprep.subr.bf16.mxu0 0
    %2863 = vmatpush1.bf16.msra.mxu0 0
    %2864 = vmatprep.subr.bf16.mxu0 0
    %2865 = vmatpush1.bf16.msra.mxu0 0
    %2866 = vmatprep.subr.bf16.mxu0 0
    %2867 = vmatpush1.bf16.msra.mxu0 0
    %2868 = vmatprep.subr.bf16.mxu0 0
    %2869 = vmatpush1.bf16.msra.mxu0 0
    %2870 = vmatprep.subr.bf16.mxu0 0
    %2871 = vmatpush1.bf16.msra.mxu0 0
    %2872 = vmatprep.subr.bf16.mxu0 0
    %2873 = vmatpush1.bf16.msra.mxu0 0
    %2874 = vmatprep.subr.bf16.mxu0 0
    %2875 = vmatpush1.bf16.msra.mxu0 0
    %2876 = vmatprep.mubr.bf16.mxu0 0
    %2877 = vmatmul.mubr.bf16.gmra.mrb[0].mxu0 %v2836
    %v2878 = vpop.f32.mrb[0].mxu0
    %v2879 = vadd.f32 0.0, %v2878
    %v2880 = vpop.f32.mrb[0].mxu0
    %v2881 = vpop.f32.mrb[0].mxu0
    %v2882 = vadd.f32 0.0, %v2881
    %v2883 = vpop.f32.mrb[0].mxu0
    %2884 = vmatprep.mubr.bf16.mxu0 0
    %2885 = vmatmul.mubr.bf16.gmra.mrb[0].mxu0 %v2839
    %v2886 = vpop.f32.mrb[0].mxu0
    %v2887 = vadd.f32 0.0, %v2886
    %v2888 = vpop.f32.mrb[0].mxu0
    %v2889 = vpop.f32.mrb[0].mxu0
    %v2890 = vadd.f32 0.0, %v2889
    %v2891 = vpop.f32.mrb[0].mxu0
    %2892 = vdwg.mxu0
    %v2893 = vld [vmem:[%s12] sm:$0x1]
    %v2894 = vld [vmem:[%s13] sm:$0x1]
    %v2896 = vlaneseq
    %v2897 = vshrl.u32 %v2896, 7
    %v2898 = vsub.s32 0, %v2897
    %v2899 = vrot.slane %v2893, %v2898
    %v2901 = vmul.f32 %v2879, %v2899
    %v2902 = vmul.f32 %v2882, %v2899
    %v2903 = vmul.f32 %v2887, %v2899
    %v2904 = vmul.f32 %v2890, %v2899
    %v2906 = vlaneseq
    %v2907 = vshrl.u32 %v2906, 7
    %v2908 = vsub.s32 0, %v2907
    %v2909 = vrot.slane %v2894, %v2908
    %v2911 = vadd.f32 %v2901, %v2909
    %v2912 = vadd.f32 %v2902, %v2909
    %v2913 = vadd.f32 %v2903, %v2909
    %v2914 = vadd.f32 %v2904, %v2909
    %v2919 = vcombine.high %v2911, %v2911
    %v2921 = vunpack.c.l.s4 1983009808
    %v2922 = vunpack.c.0.s8 %v2921
    %v2923 = vlaneseq
    %v2924 = vshrl.u32 %v2923, 7
    %v2925 = vsub.s32 %v2922, %v2924
    %v2926 = vrot.slane %v2911, %v2925
    %v2928 = vunpack.c.l.s4 1983009808
    %v2929 = vunpack.c.0.s8 %v2928
    %v2930 = vlaneseq
    %v2931 = vshrl.u32 %v2930, 7
    %v2932 = vsub.s32 %v2929, %v2931
    %v2933 = vrot.slane %v2919, %v2932
    %v2934 = vcombine.high %v2926, %v2926
    %v2935 = vcombine.high %v2933, %v2933
    %v2936 = vcombine.high %v2912, %v2912
    %v2938 = vunpack.c.l.s4 1983009808
    %v2939 = vunpack.c.0.s8 %v2938
    %v2940 = vlaneseq
    %v2941 = vshrl.u32 %v2940, 7
    %v2942 = vsub.s32 %v2939, %v2941
    %v2943 = vrot.slane %v2912, %v2942
    %v2945 = vunpack.c.l.s4 1983009808
    %v2946 = vunpack.c.0.s8 %v2945
    %v2947 = vlaneseq
    %v2948 = vshrl.u32 %v2947, 7
    %v2949 = vsub.s32 %v2946, %v2948
    %v2950 = vrot.slane %v2936, %v2949
    %v2951 = vcombine.high %v2943, %v2943
    %v2952 = vcombine.high %v2950, %v2950
    %v2953 = vcombine.high %v2913, %v2913
    %v2955 = vunpack.c.l.s4 1983009808
    %v2956 = vunpack.c.0.s8 %v2955
    %v2957 = vlaneseq
    %v2958 = vshrl.u32 %v2957, 7
    %v2959 = vsub.s32 %v2956, %v2958
    %v2960 = vrot.slane %v2913, %v2959
    %v2962 = vunpack.c.l.s4 1983009808
    %v2963 = vunpack.c.0.s8 %v2962
    %v2964 = vlaneseq
    %v2965 = vshrl.u32 %v2964, 7
    %v2966 = vsub.s32 %v2963, %v2965
    %v2967 = vrot.slane %v2953, %v2966
    %v2968 = vcombine.high %v2960, %v2960
    %v2969 = vcombine.high %v2967, %v2967
    %v2970 = vcombine.high %v2914, %v2914
    %v2972 = vunpack.c.l.s4 1983009808
    %v2973 = vunpack.c.0.s8 %v2972
    %v2974 = vlaneseq
    %v2975 = vshrl.u32 %v2974, 7
    %v2976 = vsub.s32 %v2973, %v2975
    %v2977 = vrot.slane %v2914, %v2976
    %v2979 = vunpack.c.l.s4 1983009808
    %v2980 = vunpack.c.0.s8 %v2979
    %v2981 = vlaneseq
    %v2982 = vshrl.u32 %v2981, 7
    %v2983 = vsub.s32 %v2980, %v2982
    %v2984 = vrot.slane %v2970, %v2983
    %v2985 = vcombine.high %v2977, %v2977
    %v2986 = vcombine.high %v2984, %v2984
    %vm3003 = vcmask 25600
    %v3004 = vsel %vm3003, %v2926, -inf
    %v3005 = vrot.slane %v3004, 4
    %v3006 = vmax.f32 %v3004, %v3005
    %v3007 = vrot.slane %v3006, 2
    %v3008 = vmax.f32 %v3006, %v3007
    %v3009 = vrot.slane %v3008, 1
    %v3010 = vmax.f32 %v3008, %v3009
    %v3011 = vsel %vm3003, %v2934, -inf
    %v3012 = vrot.slane %v3011, 4
    %v3013 = vmax.f32 %v3011, %v3012
    %v3014 = vrot.slane %v3013, 2
    %v3015 = vmax.f32 %v3013, %v3014
    %v3016 = vrot.slane %v3015, 1
    %v3017 = vmax.f32 %v3015, %v3016
    %v3018 = vsel %vm3003, %v2933, -inf
    %v3019 = vrot.slane %v3018, 4
    %v3020 = vmax.f32 %v3018, %v3019
    %v3021 = vrot.slane %v3020, 2
    %v3022 = vmax.f32 %v3020, %v3021
    %v3023 = vrot.slane %v3022, 1
    %v3024 = vmax.f32 %v3022, %v3023
    %v3025 = vsel %vm3003, %v2935, -inf
    %v3026 = vrot.slane %v3025, 4
    %v3027 = vmax.f32 %v3025, %v3026
    %v3028 = vrot.slane %v3027, 2
    %v3029 = vmax.f32 %v3027, %v3028
    %v3030 = vrot.slane %v3029, 1
    %v3031 = vmax.f32 %v3029, %v3030
    %v3032 = vsel %vm3003, %v2943, -inf
    %v3033 = vrot.slane %v3032, 4
    %v3034 = vmax.f32 %v3032, %v3033
    %v3035 = vrot.slane %v3034, 2
    %v3036 = vmax.f32 %v3034, %v3035
    %v3037 = vrot.slane %v3036, 1
    %v3038 = vmax.f32 %v3036, %v3037
    %v3039 = vsel %vm3003, %v2951, -inf
    %v3040 = vrot.slane %v3039, 4
    %v3041 = vmax.f32 %v3039, %v3040
    %v3042 = vrot.slane %v3041, 2
    %v3043 = vmax.f32 %v3041, %v3042
    %v3044 = vrot.slane %v3043, 1
    %v3045 = vmax.f32 %v3043, %v3044
    %v3046 = vsel %vm3003, %v2950, -inf
    %v3047 = vrot.slane %v3046, 4
    %v3048 = vmax.f32 %v3046, %v3047
    %v3049 = vrot.slane %v3048, 2
    %v3050 = vmax.f32 %v3048, %v3049
    %v3051 = vrot.slane %v3050, 1
    %v3052 = vmax.f32 %v3050, %v3051
    %v3053 = vsel %vm3003, %v2952, -inf
    %v3054 = vrot.slane %v3053, 4
    %v3055 = vmax.f32 %v3053, %v3054
    %v3056 = vrot.slane %v3055, 2
    %v3057 = vmax.f32 %v3055, %v3056
    %v3058 = vrot.slane %v3057, 1
    %v3059 = vmax.f32 %v3057, %v3058
    %v3060 = vsel %vm3003, %v2960, -inf
    %v3061 = vrot.slane %v3060, 4
    %v3062 = vmax.f32 %v3060, %v3061
    %v3063 = vrot.slane %v3062, 2
    %v3064 = vmax.f32 %v3062, %v3063
    %v3065 = vrot.slane %v3064, 1
    %v3066 = vmax.f32 %v3064, %v3065
    %v3067 = vsel %vm3003, %v2968, -inf
    %v3068 = vrot.slane %v3067, 4
    %v3069 = vmax.f32 %v3067, %v3068
    %v3070 = vrot.slane %v3069, 2
    %v3071 = vmax.f32 %v3069, %v3070
    %v3072 = vrot.slane %v3071, 1
    %v3073 = vmax.f32 %v3071, %v3072
    %v3074 = vsel %vm3003, %v2967, -inf
    %v3075 = vrot.slane %v3074, 4
    %v3076 = vmax.f32 %v3074, %v3075
    %v3077 = vrot.slane %v3076, 2
    %v3078 = vmax.f32 %v3076, %v3077
    %v3079 = vrot.slane %v3078, 1
    %v3080 = vmax.f32 %v3078, %v3079
    %v3081 = vsel %vm3003, %v2969, -inf
    %v3082 = vrot.slane %v3081, 4
    %v3083 = vmax.f32 %v3081, %v3082
    %v3084 = vrot.slane %v3083, 2
    %v3085 = vmax.f32 %v3083, %v3084
    %v3086 = vrot.slane %v3085, 1
    %v3087 = vmax.f32 %v3085, %v3086
    %v3088 = vsel %vm3003, %v2977, -inf
    %v3089 = vrot.slane %v3088, 4
    %v3090 = vmax.f32 %v3088, %v3089
    %v3091 = vrot.slane %v3090, 2
    %v3092 = vmax.f32 %v3090, %v3091
    %v3093 = vrot.slane %v3092, 1
    %v3094 = vmax.f32 %v3092, %v3093
    %v3095 = vsel %vm3003, %v2985, -inf
    %v3096 = vrot.slane %v3095, 4
    %v3097 = vmax.f32 %v3095, %v3096
    %v3098 = vrot.slane %v3097, 2
    %v3099 = vmax.f32 %v3097, %v3098
    %v3100 = vrot.slane %v3099, 1
    %v3101 = vmax.f32 %v3099, %v3100
    %v3102 = vsel %vm3003, %v2984, -inf
    %v3103 = vrot.slane %v3102, 4
    %v3104 = vmax.f32 %v3102, %v3103
    %v3105 = vrot.slane %v3104, 2
    %v3106 = vmax.f32 %v3104, %v3105
    %v3107 = vrot.slane %v3106, 1
    %v3108 = vmax.f32 %v3106, %v3107
    %v3109 = vsel %vm3003, %v2986, -inf
    %v3110 = vrot.slane %v3109, 4
    %v3111 = vmax.f32 %v3109, %v3110
    %v3112 = vrot.slane %v3111, 2
    %v3113 = vmax.f32 %v3111, %v3112
    %v3114 = vrot.slane %v3113, 1
    %v3115 = vmax.f32 %v3113, %v3114
    %v3120 = vsel %vm1969, %v3038, %v3010
    %v3121 = vsel %vm1971, %v3066, %v3120
    %v3122 = vsel %vm1973, %v3094, %v3121
    %v3128 = vsel %vm1969, %v3045, %v3017
    %v3129 = vsel %vm1971, %v3073, %v3128
    %v3130 = vsel %vm1973, %v3101, %v3129
    %3131 = vrot.lane.b32.xlu0 %v3130, 4
    %v3132 = vpop.permute.xlu0 %3131
    %v3138 = vsel %vm1969, %v3052, %v3024
    %v3139 = vsel %vm1971, %v3080, %v3138
    %v3140 = vsel %vm1973, %v3108, %v3139
    %3141 = vrot.lane.b32.xlu0 %v3140, 8
    %v3142 = vpop.permute.xlu0 %3141
    %v3148 = vsel %vm1969, %v3059, %v3031
    %v3149 = vsel %vm1971, %v3087, %v3148
    %v3150 = vsel %vm1973, %v3115, %v3149
    %3151 = vrot.lane.b32.xlu0 %v3150, 12
    %v3152 = vpop.permute.xlu0 %3151
    %vm3154 = vcmask 31744
    %v3155 = vsel %vm3154, %v3122, %v3132
    %v3156 = vsel %vm2814, %v3155, %v3142
    %vm3157 = vcmask 97280
    %v3158 = vsel %vm3157, %v3156, %v3152
    %v3159 = vpack.c.bf16 %v3158, %v3158
    %v3160 = vld [vmem:[%s14] sm:$0xf]
    %v3161 = vld [vmem:[%s14 + $0x4] sm:$0xf]
    %v3162 = vld [vmem:[%s15] sm:$0x1]
    %v3164 = vlaneseq
    %v3165 = vshrl.u32 %v3164, 7
    %v3166 = vsub.s32 0, %v3165
    %v3167 = vrot.slane %v3162, %v3166
    %v3171 = vunpack.c.l.b16 %v3160
    %v3172 = vunpack.c.l.b16 %v3161
    %v3173 = vpack.c.b16 %v3172, %v3171
    %v3176 = vsel %vm2146, %v3159, 0
    %3178 = vmatprep.subr.bf16.mxu0 0
    %3179 = vmatpush1.bf16.msra.mxu0 %v3173
    %3180 = vmatprep.subr.bf16.mxu0 0
    %3181 = vmatpush1.bf16.msra.mxu0 0
    %3182 = vmatprep.subr.bf16.mxu0 0
    %3183 = vmatpush1.bf16.msra.mxu0 0
    %3184 = vmatprep.subr.bf16.mxu0 0
    %3185 = vmatpush1.bf16.msra.mxu0 0
    %3186 = vmatprep.subr.bf16.mxu0 0
    %3187 = vmatpush1.bf16.msra.mxu0 0
    %3188 = vmatprep.subr.bf16.mxu0 0
    %3189 = vmatpush1.bf16.msra.mxu0 0
    %3190 = vmatprep.subr.bf16.mxu0 0
    %3191 = vmatpush1.bf16.msra.mxu0 0
    %3192 = vmatprep.subr.bf16.mxu0 0
    %3193 = vmatpush1.bf16.msra.mxu0 0
    %3194 = vmatprep.subr.bf16.mxu0 0
    %3195 = vmatpush1.bf16.msra.mxu0 0
    %3196 = vmatprep.subr.bf16.mxu0 0
    %3197 = vmatpush1.bf16.msra.mxu0 0
    %3198 = vmatprep.subr.bf16.mxu0 0
    %3199 = vmatpush1.bf16.msra.mxu0 0
    %3200 = vmatprep.subr.bf16.mxu0 0
    %3201 = vmatpush1.bf16.msra.mxu0 0
    %3202 = vmatprep.subr.bf16.mxu0 0
    %3203 = vmatpush1.bf16.msra.mxu0 0
    %3204 = vmatprep.subr.bf16.mxu0 0
    %3205 = vmatpush1.bf16.msra.mxu0 0
    %3206 = vmatprep.subr.bf16.mxu0 0
    %3207 = vmatpush1.bf16.msra.mxu0 0
    %3208 = vmatprep.subr.bf16.mxu0 0
    %3209 = vmatpush1.bf16.msra.mxu0 0
    %3210 = vmatprep.mubr.bf16.mxu0 0
    %3211 = vmatmul.mubr.bf16.gmra.mrb[0].mxu0 %v3176
    %v3212 = vpop.f32.mrb[0].mxu0
    %v3213 = vadd.f32 %v3167, %v3212
    %v3214 = vpop.f32.mrb[0].mxu0
    %v3215 = vpop.f32.mrb[0].mxu0
    %v3216 = vpop.f32.mrb[0].mxu0
    %3217 = vdwg.mxu0
    %vm3218 = vcmask 44032
    %3219 = vst.msk [vmem:[#allocation4] sm:$0xf] %vm3218, %v3213
    // Predicated region
    $region66: #{tpu_custom_call.1} parent=1 // pred_check
      _
    $region67: #{tpu_custom_call.1} parent=1 // pred_check_branch
      %3221 = sbr.rel (0) target = $region69
    $region68: #{tpu_custom_call.1} parent=1 // pred_region
      %s3223 = ssub.s32 64, 64
      %3224 = vsyncadd [#allocation3], %s3223
      %s3226 = sshll.u32 [#allocation2], 4
      %s3227 = int_to_ptr.vmem [resolvable:$true] %s3226
      %3229 = dma.vmem_to_hbm [thread:$0]  %s3227, 64, %s16, [#allocation3]
    $region69: #{tpu_custom_call.1} parent=1 // pred_fallthru
      _
    // Predicated region
    $region70: #{tpu_custom_call.1} parent=1 // pred_check
      _
    $region71: #{tpu_custom_call.1} parent=1 // pred_check_branch
      %3231 = sbr.rel (0) target = $region73
    $region72: #{tpu_custom_call.1} parent=1 // pred_region
      %s3233 = ssub.s32 64, 64
      %3234 = vsyncadd [#allocation5], %s3233
      %s3236 = sshll.u32 [#allocation4], 4
      %s3237 = int_to_ptr.vmem [resolvable:$true] %s3236
      %3239 = dma.vmem_to_hbm [thread:$0]  %s3237, 64, %s17, [#allocation5]
    $region73: #{tpu_custom_call.1} parent=1 // pred_fallthru
      _
    // Predicated region
    $region74: #{tpu_custom_call.1} parent=1 // pred_check
      _
    $region75: #{tpu_custom_call.1} parent=1 // pred_check_branch
      %3241 = sbr.rel (0) target = $region77
    $region76: #{tpu_custom_call.1} parent=1 // pred_region
      %3242 = dma.done [#allocation3], 64
    $region77: #{tpu_custom_call.1} parent=1 // pred_fallthru
      _
    // Predicated region
    $region78: #{tpu_custom_call.1} parent=1 // pred_check
      _
    $region79: #{tpu_custom_call.1} parent=1 // pred_check_branch
      %3244 = sbr.rel (0) target = $region81
    $region80: #{tpu_custom_call.1} parent=1 // pred_region
      %3245 = dma.done [#allocation5], 64
    $region81: #{tpu_custom_call.1} parent=1 // pred_fallthru
      _
    %3246 = vsyncpa [#allocation3], 1
    %3247 = vsyncpa [#allocation5], 1

</llo_original>
